<compile_context>
chip_gen: v7x
topology: tpu7x:2x2x1
jax: 0.10.0
libtpu: 0.0.40
codegen_flags: <defaults>
</compile_context>

<pallas_src>
import functools

import jax
import jax.numpy as jnp
from jax.experimental import pallas as pl
from jax.experimental.pallas import tpu as pltpu

K = 3            # conv kernel size (both layers), 'same' padding
NEG_SLOPE = 0.2  # LeakyReLU slope
LANE = 128       # TPU vreg lane width
SUBLANE = 8      # f32 sublane height
HALO = 1         # time halo each side of a tile (what conv2's +-1 taps need)


def _round_up(x, m):
    return ((x + m - 1) // m) * m


def _pick_time_tile(t_pad, batch):
    """Largest tile (fewest grid steps, best MXU M) that still leaves >= 2
    grid steps when possible (keeps both v7x TensorCores busy).  Per-tile
    intermediates at TT=4096 are ~9 MiB, well inside the 32 MiB scoped VMEM
    budget on every generation (v5e / v6e / v7x)."""
    candidates = [tt for tt in (4096, 2048, 1024, 512, 256, 128)
                  if t_pad % tt == 0]
    if not candidates:
        return t_pad
    for tt in candidates:
        if batch * (t_pad // tt) >= 2:
            return tt
    return candidates[-1]


def _encoder_kernel(x_ref, w1_ref, b1_ref, w2_ref, b2_ref, z_ref,
                    *, seq_len, time_tile):
    """One (batch, time-tile) grid step.  Time lives on lanes, channels on
    sublanes, so the result is stored directly in (C_out, T) order.

    x_ref:  (1, 1, CTAP, TT+4) bf16  halo'd NCL input tile (C_in padded to 8)
    w1_ref: (HP, K*CTAP)       bf16  conv1 weights, transposed + lane-padded
    b1_ref: (HP, 1)            f32
    w2_ref: (CP, K*HP)         bf16  conv2 weights, 3 taps fused along K
    b2_ref: (CP, 1)            f32
    z_ref:  (1, C_out, TT)     f32   output tile, PyTorch NCL layout
    """
    tt = time_tile
    r = tt + 2 * HALO                     # h lanes needed (centre +- 1)
    c_out = z_ref.shape[1]

    x = x_ref[0, 0]                       # (CTAP, TT + 4) bf16

    # ---- conv1: in-kernel im2col (3 lane-shifted taps) -> one MXU matmul ----
    x_col = jnp.concatenate([x[:, k:k + r] for k in range(K)], axis=0)  # (K*CTAP, R)
    h = jnp.dot(w1_ref[...], x_col, preferred_element_type=jnp.float32)  # (HP, R)
    h = h + b1_ref[...]
    h = jnp.where(h >= 0.0, h, NEG_SLOPE * h)          # LeakyReLU(0.2), f32 VPU

    # Lanes whose global time falls outside [0, seq_len) act as conv2's zero
    # padding (conv2 pads h, not conv1(zero-padded x)), so force them to 0.
    g = (pl.program_id(1) * tt - HALO) + jax.lax.broadcasted_iota(
        jnp.int32, (1, r), 1)
    h = jnp.where((g >= 0) & (g < seq_len), h, 0.0)

    # ---- conv2: single bf16 cast, 3 taps fused along K -> one MXU matmul ----
    h_bf = h.astype(jnp.bfloat16)                       # cast once, slice thrice
    h_col = jnp.concatenate([h_bf[:, k:k + tt] for k in range(K)],
                            axis=0)                     # (K*HP, TT)
    acc = jnp.dot(w2_ref[...], h_col, preferred_element_type=jnp.float32)  # (CP, TT)
    acc = acc + b2_ref[...]

    # Only the real output channels are written; lane-dense over time, already
    # in PyTorch (C_out, T) order -> no transpose, no wrapper post-processing.
    z_ref[0] = acc[:c_out, :].astype(z_ref.dtype)


def variational_encoder_forward(x_ncl, params, warmed_up=False, time_tile=None):
    """x_ncl: (B, C_in, T) float32, PyTorch NCL layout.  Returns (B, 2*latent, T)."""
    w1, b1, w2, b2 = params["w1"], params["b1"], params["w2"], params["b2"]
    B, C_in, T = x_ncl.shape
    k_w, c_in_w, H = w1.shape
    assert k_w == K and c_in_w == C_in
    C_out = w2.shape[2]                       # 2 * latent

    if time_tile is None:
        T_pad = _round_up(T, LANE)
        TT = _pick_time_tile(T_pad, B)
    else:
        TT = int(time_tile)
        T_pad = _round_up(T, TT)
    assert TT % LANE == 0 or T_pad == TT, "time_tile must be a multiple of 128"
    n_tt = T_pad // TT

    HP = _round_up(H, LANE)
    CP = _round_up(C_out, LANE)
    CTAP = _round_up(C_in, SUBLANE)           # per-tap channel rows (8-aligned)
    R_in = TT + 2 * HALO + 2                  # input columns needed per tile

    # ---- weight packing (tiny; done once wrapper-side) ----------------------
    # conv1: (HP, K*CTAP) with w1_t[h, k*CTAP + c] = w1[k, c, h]
    w1_p = jnp.pad(w1, ((0, 0), (0, CTAP - C_in), (0, HP - H)))
    w1_t = jnp.transpose(w1_p, (2, 0, 1)).reshape(HP, K * CTAP).astype(jnp.bfloat16)
    b1_c = jnp.pad(b1.reshape(H, 1), ((0, HP - H), (0, 0))).astype(jnp.float32)
    # conv2 with taps fused along K: (CP, K*HP) with w2_f[o, k*HP + h] = w2[k, h, o]
    w2_p = jnp.pad(w2, ((0, 0), (0, HP - H), (0, CP - C_out)))
    w2_f = jnp.transpose(w2_p, (2, 0, 1)).reshape(CP, K * HP).astype(jnp.bfloat16)
    b2_c = jnp.pad(b2.reshape(C_out, 1), ((0, CP - C_out), (0, 0))).astype(jnp.float32)

    # ---- halo'd NCL input tiles: pad + static slices + stack (no gather) ----
    #   x_tiles[b, t, c, j] = x[b, c, t*TT + j - 2]     (0 outside [0, T))
    x_p = jnp.pad(x_ncl, ((0, 0), (0, CTAP - C_in),
                          (HALO + 1, HALO + 1 + (T_pad - T))))
    x_tiles = jnp.stack([x_p[:, :, t * TT: t * TT + R_in] for t in range(n_tt)],
                        axis=1).astype(jnp.bfloat16)    # (B, n_tt, CTAP, R_in)

    kernel = functools.partial(_encoder_kernel, seq_len=T, time_tile=TT)

    z = pl.pallas_call(
        kernel,
        out_shape=jax.ShapeDtypeStruct((B, C_out, T_pad), jnp.float32),
        grid_spec=pltpu.PrefetchScalarGridSpec(
            num_scalar_prefetch=0,
            grid=(B, n_tt),
            in_specs=[
                pl.BlockSpec((1, 1, CTAP, R_in), lambda b, t: (b, t, 0, 0)),
                pl.BlockSpec((HP, K * CTAP), lambda b, t: (0, 0)),
                pl.BlockSpec((HP, 1), lambda b, t: (0, 0)),
                pl.BlockSpec((CP, K * HP), lambda b, t: (0, 0)),
                pl.BlockSpec((CP, 1), lambda b, t: (0, 0)),
            ],
            out_specs=pl.BlockSpec((1, C_out, TT), lambda b, t: (b, 0, t)),
        ),
        compiler_params=pltpu.CompilerParams(
            # both axes independent -> megacore-shardable on v7x
            dimension_semantics=("parallel", "parallel"),
            # ~9 MiB of per-tile intermediates at TT=4096 + double-buffered
            # I/O fits the 32 MiB scoped budget on every generation; we do not
            # ask for more because v7x only has 64 MiB physical VMEM.
            vmem_limit_bytes=32 * 1024 * 1024,
        ),
    )(x_tiles, w1_t, b1_c, w2_f, b2_c)

    z = z[:, :, :T]                           # drop the 128-alignment padding

    # `if self.warmed_up: z = z.detach()` -- no numerical effect on forward.
    if warmed_up:
        z = jax.lax.stop_gradient(z)
    return z


def _reference_forward(x_ncl, params):
    """Pure-JAX f32 reference of the same encoder (for correctness checking)."""
    w1, b1, w2, b2 = params["w1"], params["b1"], params["w2"], params["b2"]
    B, C_in, T = x_ncl.shape
    x = jnp.transpose(x_ncl, (0, 2, 1))
    xp = jnp.pad(x, ((0, 0), (1, 1), (0, 0)))
    h = sum(jnp.einsum("btc,ch->bth", xp[:, k:k + T, :], w1[k])
            for k in range(K)) + b1
    h = jnp.where(h >= 0, h, NEG_SLOPE * h)
    hp = jnp.pad(h, ((0, 0), (1, 1), (0, 0)))
    z = sum(jnp.einsum("bth,ho->bto", hp[:, k:k + T, :], w2[k])
            for k in range(K)) + b2
    return jnp.transpose(z, (0, 2, 1))


def reparametrize(z, key):
    """Plain-JAX port of VariationalEncoder.reparametrize (not part of forward;
    provided for completeness / parity checking)."""
    mean, scale = jnp.split(z, 2, axis=1)
    std = jax.nn.softplus(scale) + 1e-4
    var = std * std
    logvar = jnp.log(var)
    z_s = jax.random.normal(key, mean.shape, mean.dtype) * std + mean
    kl = jnp.mean(jnp.sum(mean * mean + var - logvar - 1.0, axis=1))
    return z_s, kl


def init_params(key, c_in, hidden, latent):
    k1, k2, k3, k4 = jax.random.split(key, 4)
    c_out = 2 * latent
    return {
        "w1": 0.1 * jax.random.normal(k1, (K, c_in, hidden), jnp.float32),
        "b1": 0.01 * jax.random.normal(k2, (1, hidden), jnp.float32),
        "w2": 0.1 * jax.random.normal(k3, (K, hidden, c_out), jnp.float32),
        "b2": 0.01 * jax.random.normal(k4, (1, c_out), jnp.float32),
    }


if __name__ == "__main__":
    B, C_IN, T = 2, 4, 512
    HIDDEN, LATENT = 32, 8

    root = jax.random.PRNGKey(0)
    kx, kp, kodd, kz = jax.random.split(root, 4)

    x = jax.random.normal(kx, (B, C_IN, T), jnp.float32)   # NCL like PyTorch
    params = init_params(kp, C_IN, HIDDEN, LATENT)
    z_ref = _reference_forward(x, params)

    # 1) default (perf) config: TT = 512 -> grid (B, 1) = 2 steps (megacore-OK).
    fwd = jax.jit(functools.partial(variational_encoder_forward, warmed_up=False))
    z = fwd(x, params)
    jax.block_until_ready(z)
    assert z.shape == (B, 2 * LATENT, T), z.shape
    rel = jnp.linalg.norm(z - z_ref) / jnp.linalg.norm(z_ref)
    assert float(rel) < 4e-2, f"relative error too large: {float(rel)}"

    # 2) multi-tile config: exercises halo handling at interior tile borders
    #    (and the warmed_up / stop_gradient path).
    fwd_tiled = jax.jit(functools.partial(variational_encoder_forward,
                                          warmed_up=True, time_tile=256))
    z_t = fwd_tiled(x, params)
    jax.block_until_ready(z_t)
    rel_t = jnp.linalg.norm(z_t - z_ref) / jnp.linalg.norm(z_ref)
    assert float(rel_t) < 4e-2, f"relative error (tiled) too large: {float(rel_t)}"

    # 3) T not a multiple of 128: exercises the pad-to-128 + mask path.
    x_odd = jax.random.normal(kodd, (B, C_IN, 200), jnp.float32)
    z_odd = jax.jit(functools.partial(variational_encoder_forward,
                                      warmed_up=False))(x_odd, params)
    jax.block_until_ready(z_odd)
    z_odd_ref = _reference_forward(x_odd, params)
    rel_o = jnp.linalg.norm(z_odd - z_odd_ref) / jnp.linalg.norm(z_odd_ref)
    assert float(rel_o) < 4e-2, f"relative error (padded T) too large: {float(rel_o)}"

    # exercise the reparametrize helper too (outside the traced forward)
    z_s, kl = reparametrize(z, kz)
    jax.block_until_ready((z_s, kl))

    print("KERNEL_OK")
</pallas_src>

<mosaic_0001>
module attributes {stable_mosaic.version = 11 : i64} {
  func.func @_encoder_kernel(%arg0: i32, %arg1: i32, %arg2: memref<1x1x8x516xbf16, #tpu.memory_space<vmem>>, %arg3: memref<128x24xbf16, #tpu.memory_space<vmem>>, %arg4: memref<128x1xf32, #tpu.memory_space<vmem>>, %arg5: memref<128x384xbf16, #tpu.memory_space<vmem>>, %arg6: memref<128x1xf32, #tpu.memory_space<vmem>>, %arg7: memref<1x16x512xf32, #tpu.memory_space<vmem>>) attributes {dimension_semantics = [#tpu.dimension_semantics<parallel>, #tpu.dimension_semantics<parallel>], iteration_bounds = array<i64: 2, 1>, scalar_prefetch = 0 : i64, scratch_operands = 0 : i64, tpu.core_type = #tpu.core_type<tc>, window_params = [{transform_indices = @transform_0, window_bounds = array<i64: 1, 1, 8, 516>}, {pipeline_mode = #tpu.pipeline_mode<synchronous>, transform_indices = @transform_1, window_bounds = array<i64: 128, 24>}, {pipeline_mode = #tpu.pipeline_mode<synchronous>, transform_indices = @transform_2, window_bounds = array<i64: 128, 1>}, {pipeline_mode = #tpu.pipeline_mode<synchronous>, transform_indices = @transform_3, window_bounds = array<i64: 128, 384>}, {pipeline_mode = #tpu.pipeline_mode<synchronous>, transform_indices = @transform_4, window_bounds = array<i64: 128, 1>}, {transform_indices = @transform_5, window_bounds = array<i64: 1, 16, 512>}]} {
    %c0 = arith.constant 0 : index
    %c0_0 = arith.constant 0 : index
    %c0_1 = arith.constant 0 : index
    %c0_2 = arith.constant 0 : index
    %0 = vector.load %arg2[%c0, %c0_0, %c0_1, %c0_2] : memref<1x1x8x516xbf16, #tpu.memory_space<vmem>>, vector<1x1x8x516xbf16>
    %1 = vector.shape_cast %0 : vector<1x1x8x516xbf16> to vector<8x516xbf16>
    %2 = vector.extract_strided_slice %1 {offsets = [0, 0], sizes = [8, 514], strides = [1, 1]} : vector<8x516xbf16> to vector<8x514xbf16>
    %3 = vector.extract_strided_slice %1 {offsets = [0, 1], sizes = [8, 514], strides = [1, 1]} : vector<8x516xbf16> to vector<8x514xbf16>
    %4 = vector.extract_strided_slice %1 {offsets = [0, 2], sizes = [8, 514], strides = [1, 1]} : vector<8x516xbf16> to vector<8x514xbf16>
    %5 = tpu.concatenate %2, %3, %4 in 0 : vector<8x514xbf16>, vector<8x514xbf16>, vector<8x514xbf16> -> vector<24x514xbf16>
    %c0_3 = arith.constant 0 : index
    %c0_4 = arith.constant 0 : index
    %6 = vector.load %arg3[%c0_3, %c0_4] : memref<128x24xbf16, #tpu.memory_space<vmem>>, vector<128x24xbf16>
    %cst = arith.constant dense<0.000000e+00> : vector<128x514xf32>
    %7 = tpu.matmul %6, %5, %cst {dimension_numbers = #tpu.dot_dimension_numbers<[1], [0], [0], [1], [0, 0, 1, 1], [], []>} : vector<128x24xbf16>, vector<24x514xbf16>, vector<128x514xf32> -> vector<128x514xf32>
    %c0_5 = arith.constant 0 : index
    %c0_6 = arith.constant 0 : index
    %8 = vector.load %arg4[%c0_5, %c0_6] : memref<128x1xf32, #tpu.memory_space<vmem>>, vector<128x1xf32>
    %9 = vector.broadcast %8 : vector<128x1xf32> to vector<128x514xf32>
    %10 = arith.addf %7, %9 : vector<128x514xf32>
    %cst_7 = arith.constant 0.000000e+00 : f32
    %11 = vector.broadcast %cst_7 : f32 to vector<128x514xf32>
    %12 = arith.cmpf oge, %10, %11 : vector<128x514xf32>
    %cst_8 = arith.constant 2.000000e-01 : f32
    %13 = vector.broadcast %cst_8 : f32 to vector<128x514xf32>
    %14 = arith.mulf %13, %10 : vector<128x514xf32>
    %15 = arith.select %12, %10, %14 : vector<128x514xi1>, vector<128x514xf32>
    %c512_i32 = arith.constant 512 : i32
    %16 = arith.muli %arg1, %c512_i32 : i32
    %c1_i32 = arith.constant 1 : i32
    %17 = arith.subi %16, %c1_i32 : i32
    %18 = tpu.iota {dimensions = array<i32: 1>} : vector<1x514xi32>
    %19 = vector.broadcast %17 : i32 to vector<1x514xi32>
    %20 = arith.addi %19, %18 : vector<1x514xi32>
    %c0_i32 = arith.constant 0 : i32
    %21 = vector.broadcast %c0_i32 : i32 to vector<1x514xi32>
    %22 = arith.cmpi sge, %20, %21 : vector<1x514xi32>
    %c512_i32_9 = arith.constant 512 : i32
    %23 = vector.broadcast %c512_i32_9 : i32 to vector<1x514xi32>
    %24 = arith.cmpi slt, %20, %23 : vector<1x514xi32>
    %25 = arith.andi %22, %24 : vector<1x514xi1>
    %cst_10 = arith.constant 0.000000e+00 : f32
    %26 = vector.shape_cast %25 : vector<1x514xi1> to vector<1x514xi1>
    %27 = vector.broadcast %26 : vector<1x514xi1> to vector<128x514xi1>
    %28 = vector.broadcast %cst_10 : f32 to vector<128x514xf32>
    %29 = arith.select %27, %15, %28 : vector<128x514xi1>, vector<128x514xf32>
    %30 = arith.truncf %29 : vector<128x514xf32> to vector<128x514xbf16>
    %31 = vector.extract_strided_slice %30 {offsets = [0, 0], sizes = [128, 512], strides = [1, 1]} : vector<128x514xbf16> to vector<128x512xbf16>
    %32 = vector.extract_strided_slice %30 {offsets = [0, 1], sizes = [128, 512], strides = [1, 1]} : vector<128x514xbf16> to vector<128x512xbf16>
    %33 = vector.extract_strided_slice %30 {offsets = [0, 2], sizes = [128, 512], strides = [1, 1]} : vector<128x514xbf16> to vector<128x512xbf16>
    %34 = tpu.concatenate %31, %32, %33 in 0 : vector<128x512xbf16>, vector<128x512xbf16>, vector<128x512xbf16> -> vector<384x512xbf16>
    %c0_11 = arith.constant 0 : index
    %c0_12 = arith.constant 0 : index
    %35 = vector.load %arg5[%c0_11, %c0_12] : memref<128x384xbf16, #tpu.memory_space<vmem>>, vector<128x384xbf16>
    %cst_13 = arith.constant dense<0.000000e+00> : vector<128x512xf32>
    %36 = tpu.matmul %35, %34, %cst_13 {dimension_numbers = #tpu.dot_dimension_numbers<[1], [0], [0], [1], [0, 0, 1, 1], [], []>} : vector<128x384xbf16>, vector<384x512xbf16>, vector<128x512xf32> -> vector<128x512xf32>
    %c0_14 = arith.constant 0 : index
    %c0_15 = arith.constant 0 : index
    %37 = vector.load %arg6[%c0_14, %c0_15] : memref<128x1xf32, #tpu.memory_space<vmem>>, vector<128x1xf32>
    %38 = vector.broadcast %37 : vector<128x1xf32> to vector<128x512xf32>
    %39 = arith.addf %36, %38 : vector<128x512xf32>
    %40 = vector.extract_strided_slice %39 {offsets = [0, 0], sizes = [16, 512], strides = [1, 1]} : vector<128x512xf32> to vector<16x512xf32>
    %c0_16 = arith.constant 0 : index
    %c0_17 = arith.constant 0 : index
    %c0_18 = arith.constant 0 : index
    %41 = vector.load %arg7[%c0_16, %c0_17, %c0_18] : memref<1x16x512xf32, #tpu.memory_space<vmem>>, vector<1x16x512xf32>
    %42 = vector.shape_cast %41 : vector<1x16x512xf32> to vector<16x512xf32>
    %43 = vector.shape_cast %40 : vector<16x512xf32> to vector<1x16x512xf32>
    tpu.vector_store %arg7[%c0_16, %c0_17, %c0_18], %43 {strides = array<i32>} : memref<1x16x512xf32, #tpu.memory_space<vmem>>, vector<1x16x512xf32>,
    return
  }
  func.func @transform_0(%arg0: i32, %arg1: i32) -> (i32, i32, i32, i32) {
    %c0_i32 = arith.constant 0 : i32
    %c0_i32_0 = arith.constant 0 : i32
    %c0_i32_1 = arith.constant 0 : i32
    return %arg0, %arg1, %c0_i32, %c0_i32_0 : i32, i32, i32, i32
  }
  func.func @transform_1(%arg0: i32, %arg1: i32) -> (i32, i32) {
    %c0_i32 = arith.constant 0 : i32
    %c0_i32_0 = arith.constant 0 : i32
    %c0_i32_1 = arith.constant 0 : i32
    return %c0_i32, %c0_i32_0 : i32, i32
  }
  func.func @transform_2(%arg0: i32, %arg1: i32) -> (i32, i32) {
    %c0_i32 = arith.constant 0 : i32
    %c0_i32_0 = arith.constant 0 : i32
    %c0_i32_1 = arith.constant 0 : i32
    return %c0_i32, %c0_i32_0 : i32, i32
  }
  func.func @transform_3(%arg0: i32, %arg1: i32) -> (i32, i32) {
    %c0_i32 = arith.constant 0 : i32
    %c0_i32_0 = arith.constant 0 : i32
    %c0_i32_1 = arith.constant 0 : i32
    return %c0_i32, %c0_i32_0 : i32, i32
  }
  func.func @transform_4(%arg0: i32, %arg1: i32) -> (i32, i32) {
    %c0_i32 = arith.constant 0 : i32
    %c0_i32_0 = arith.constant 0 : i32
    %c0_i32_1 = arith.constant 0 : i32
    return %c0_i32, %c0_i32_0 : i32, i32
  }
  func.func @transform_5(%arg0: i32, %arg1: i32) -> (i32, i32, i32) {
    %c0_i32 = arith.constant 0 : i32
    %c0_i32_0 = arith.constant 0 : i32
    return %arg0, %c0_i32, %arg1 : i32, i32, i32
  }
}

</mosaic_0001>

<llo_original>
// kernel: variational_encoder_forward.1
$region0: #{variational_encoder_forward.1}
  #allocation0 [shape = 'u32[]', space=smem, size = 0x4, offset = 0x4, fixed_abs, tag = 'smem constant byte address 0x4 - core index']
  #allocation1 [shape = 'u32[144,128]{1,0:T(1,128)}', space=vmem, size = 0x12000, scoped, tag = 'internal scratch']
  %s0 = inlined_call_operand.vmem [shape: bf16[2,1,8,516], index: 0, kind: input, shape index: {}]
  %s1 = inlined_call_operand.vmem [shape: bf16[128,24], index: 1, kind: input, shape index: {}]
  %s2 = inlined_call_operand.vmem [shape: f32[128,1], index: 2, kind: input, shape index: {}]
  %s3 = inlined_call_operand.vmem [shape: bf16[128,384], index: 3, kind: input, shape index: {}]
  %s4 = inlined_call_operand.vmem [shape: f32[128,1], index: 4, kind: input, shape index: {}]
  %s5 = inlined_call_operand.hbm [shape: f32[2,16,512], index: 5, kind: output, shape index: {}]
  %s6 = sld [smem:[#allocation0]]
  $region53: #{variational_encoder_forward.1} parent=0
    _
  %s8 = ssub.s32 1, %s6
  %s9 = scalar_select 0, %s8, %s6
  $region1: #{variational_encoder_forward.1} parent=0
    #allocation2 [shape = 'u8[65536]{0}', space=vmem, size = 0x10000, scoped, tag = 'output window, operand 0']
    #allocation3 [shape = 's32[2]{0}', space=sflag, size = 0x8, scoped, tag = 'scoped memory for variational_encoder_forward.1']
    %10 = vsyncpa [#allocation3], 0
    %s11 = scalar_lea.sflag [#allocation3], 1
    %12 = vsyncpa %s11, 0
    loop: start=0, step=1, limit=4
    $region2: #{variational_encoder_forward.1} parent=1 // loop_pre_header
      _
    $region3: #{variational_encoder_forward.1} parent=1 // loop_header
      %s14 = sphi 0, %s18
      %p15 = scmp.ge.s32.totalorder %s14, 4
      %s21 = sphi 0, %s33
      %s22 = sphi 0, %s29
      %s23 = sphi 0, %s21
      %s24 = sphi 0, %s22
      %s25 = sphi 0, %s23
      %s26 = sphi 0, %s24
      %s38 = sphi 0, %s40
      %s41 = sphi 0, %s38
      %s42 = sphi 0, %s41
      %s58 = sphi 0, %s42
      %s62 = sphi 0, %s62
      %s64 = sphi 0, %s62
      %s65 = sphi 0, %s64
      %s79 = sphi 0, %s65
      %s83 = sphi 0, %s83
      %s85 = sphi 0, %s83
      %s86 = sphi 0, %s85
      %s100 = sphi 0, %s86
      %s104 = sphi 0, %s104
      %s106 = sphi 0, %s104
      %s107 = sphi 0, %s106
      %s121 = sphi 0, %s107
      %s125 = sphi 0, %s125
      %s127 = sphi 0, %s125
      %s128 = sphi 0, %s127
      %s142 = sphi 0, %s128
      %s150 = sphi 0, %s152
      %s153 = sphi 0, %s150
      %s154 = sphi 0, %s153
      %s170 = sphi 0, %s154
    $region4: #{variational_encoder_forward.1} parent=1 // loop_header_branch
      %17 = sbr.rel (%p15) target = $region8
    $region5: #{variational_encoder_forward.1} parent=1 // loop_body
      %s19 = ssub.s32 %s14, 1
      %s20 = ssub.s32 %s14, 2
      %s27 = sadd.s32 1, %s22
      %p28 = scmp.ge.s32.totalorder %s27, 1
      %s29 = scalar_select %p28, 0, %s27
      %s30 = sadd.s32 1, %s21
      %s31 = scalar_select %p28, %s30, %s21
      %p32 = scmp.ge.s32.totalorder %s31, 2
      %s33 = scalar_select %p32, 0, %s31
      %s34 = ssub.s32 %s21, %s33
      %s35 = ssub.s32 %s22, %s29
      %s36 = sor.u32 %s34, %s35
      %p37 = scmp.eq.s32.totalorder %s36, 0
      %s39 = sadd.s32 %s38, 1
      %s40 = scalar_select %p37, %s38, %s39
      %p43 = pneg %p37
      %p44 = scmp.eq.s32.totalorder %s14, 1
      %p45 = por %p43, %p44
      %p46 = scmp.ne.s32.totalorder %s38, %s41
      %p47 = scmp.eq.s32.totalorder %s14, 0
      %p48 = por %p46, %p47
      %p49 = scmp.ne.s32.totalorder %s38, %s41
      %p50 = scmp.eq.s32.totalorder %s19, 1
      %p51 = por %p49, %p50
      %p52 = scmp.ne.s32.totalorder %s41, %s42
      %p53 = scmp.eq.s32.totalorder %s19, 0
      %p54 = por %p52, %p53
      %p55 = scmp.ne.s32.totalorder %s41, %s42
      %p56 = scmp.eq.s32.totalorder %s20, 1
      %p57 = por %p55, %p56
      %p59 = scmp.ne.s32.totalorder %s42, %s58
      %p60 = scmp.eq.s32.totalorder %s20, 0
      %p61 = por %p59, %p60
      %s63 = sadd.s32 %s62, 1
      %p66 = scmp.eq.s32.totalorder %s14, 1
      %p67 = scmp.ne.s32.totalorder %s62, %s64
      %p68 = scmp.eq.s32.totalorder %s14, 0
      %p69 = por %p67, %p68
      %p70 = scmp.ne.s32.totalorder %s62, %s64
      %p71 = scmp.eq.s32.totalorder %s19, 1
      %p72 = por %p70, %p71
      %p73 = scmp.ne.s32.totalorder %s64, %s65
      %p74 = scmp.eq.s32.totalorder %s19, 0
      %p75 = por %p73, %p74
      %p76 = scmp.ne.s32.totalorder %s64, %s65
      %p77 = scmp.eq.s32.totalorder %s20, 1
      %p78 = por %p76, %p77
      %p80 = scmp.ne.s32.totalorder %s65, %s79
      %p81 = scmp.eq.s32.totalorder %s20, 0
      %p82 = por %p80, %p81
      %s84 = sadd.s32 %s83, 1
      %p87 = scmp.eq.s32.totalorder %s14, 1
      %p88 = scmp.ne.s32.totalorder %s83, %s85
      %p89 = scmp.eq.s32.totalorder %s14, 0
      %p90 = por %p88, %p89
      %p91 = scmp.ne.s32.totalorder %s83, %s85
      %p92 = scmp.eq.s32.totalorder %s19, 1
      %p93 = por %p91, %p92
      %p94 = scmp.ne.s32.totalorder %s85, %s86
      %p95 = scmp.eq.s32.totalorder %s19, 0
      %p96 = por %p94, %p95
      %p97 = scmp.ne.s32.totalorder %s85, %s86
      %p98 = scmp.eq.s32.totalorder %s20, 1
      %p99 = por %p97, %p98
      %p101 = scmp.ne.s32.totalorder %s86, %s100
      %p102 = scmp.eq.s32.totalorder %s20, 0
      %p103 = por %p101, %p102
      %s105 = sadd.s32 %s104, 1
      %p108 = scmp.eq.s32.totalorder %s14, 1
      %p109 = scmp.ne.s32.totalorder %s104, %s106
      %p110 = scmp.eq.s32.totalorder %s14, 0
      %p111 = por %p109, %p110
      %p112 = scmp.ne.s32.totalorder %s104, %s106
      %p113 = scmp.eq.s32.totalorder %s19, 1
      %p114 = por %p112, %p113
      %p115 = scmp.ne.s32.totalorder %s106, %s107
      %p116 = scmp.eq.s32.totalorder %s19, 0
      %p117 = por %p115, %p116
      %p118 = scmp.ne.s32.totalorder %s106, %s107
      %p119 = scmp.eq.s32.totalorder %s20, 1
      %p120 = por %p118, %p119
      %p122 = scmp.ne.s32.totalorder %s107, %s121
      %p123 = scmp.eq.s32.totalorder %s20, 0
      %p124 = por %p122, %p123
      %s126 = sadd.s32 %s125, 1
      %p129 = scmp.eq.s32.totalorder %s14, 1
      %p130 = scmp.ne.s32.totalorder %s125, %s127
      %p131 = scmp.eq.s32.totalorder %s14, 0
      %p132 = por %p130, %p131
      %p133 = scmp.ne.s32.totalorder %s125, %s127
      %p134 = scmp.eq.s32.totalorder %s19, 1
      %p135 = por %p133, %p134
      %p136 = scmp.ne.s32.totalorder %s127, %s128
      %p137 = scmp.eq.s32.totalorder %s19, 0
      %p138 = por %p136, %p137
      %p139 = scmp.ne.s32.totalorder %s127, %s128
      %p140 = scmp.eq.s32.totalorder %s20, 1
      %p141 = por %p139, %p140
      %p143 = scmp.ne.s32.totalorder %s128, %s142
      %p144 = scmp.eq.s32.totalorder %s20, 0
      %p145 = por %p143, %p144
      %s146 = ssub.s32 %s21, %s33
      %s147 = ssub.s32 %s22, %s29
      %s148 = sor.u32 %s146, %s147
      %p149 = scmp.eq.s32.totalorder %s148, 0
      %s151 = sadd.s32 %s150, 1
      %s152 = scalar_select %p149, %s150, %s151
      %p155 = pneg %p149
      %p156 = scmp.eq.s32.totalorder %s14, 1
      %p157 = por %p155, %p156
      %p158 = scmp.ne.s32.totalorder %s150, %s153
      %p159 = scmp.eq.s32.totalorder %s14, 0
      %p160 = por %p158, %p159
      %p161 = scmp.ne.s32.totalorder %s150, %s153
      %p162 = scmp.eq.s32.totalorder %s19, 1
      %p163 = por %p161, %p162
      %p164 = scmp.ne.s32.totalorder %s153, %s154
      %p165 = scmp.eq.s32.totalorder %s19, 0
      %p166 = por %p164, %p165
      %p167 = scmp.ne.s32.totalorder %s153, %s154
      %p168 = scmp.eq.s32.totalorder %s20, 1
      %p169 = por %p167, %p168
      %p171 = scmp.ne.s32.totalorder %s154, %s170
      %p172 = scmp.eq.s32.totalorder %s20, 0
      %p173 = por %p171, %p172
      %p174 = scmp.le.s32.totalorder 1, %s14
      %p175 = scmp.lt.s32.totalorder %s14, 3
      %p176 = pnand %p174, %p175
      %p177 = pneg %p176
      // Predicated region
      $region9: #{variational_encoder_forward.1} parent=5 // pred_check
        _
      $region10: #{variational_encoder_forward.1} parent=5 // pred_check_branch
        %179 = sbr.rel (%p176) target = $region12
      $region11: #{variational_encoder_forward.1} parent=5 // pred_region
        %s180 = ssub.s32 %s14, 1
        // Predicated region
        $region13: #{variational_encoder_forward.1} parent=11 // pred_check
          %p181 = pneg %p75
        $region14: #{variational_encoder_forward.1} parent=11 // pred_check_branch
          %183 = sbr.rel (%p181) target = $region16
        $region15: #{variational_encoder_forward.1} parent=11 // pred_region
          _
        $region16: #{variational_encoder_forward.1} parent=11 // pred_fallthru
          _
        // Predicated region
        $region17: #{variational_encoder_forward.1} parent=11 // pred_check
          %p184 = pneg %p96
        $region18: #{variational_encoder_forward.1} parent=11 // pred_check_branch
          %186 = sbr.rel (%p184) target = $region20
        $region19: #{variational_encoder_forward.1} parent=11 // pred_region
          _
        $region20: #{variational_encoder_forward.1} parent=11 // pred_fallthru
          _
        // Predicated region
        $region21: #{variational_encoder_forward.1} parent=11 // pred_check
          %p187 = pneg %p117
        $region22: #{variational_encoder_forward.1} parent=11 // pred_check_branch
          %189 = sbr.rel (%p187) target = $region24
        $region23: #{variational_encoder_forward.1} parent=11 // pred_region
          _
        $region24: #{variational_encoder_forward.1} parent=11 // pred_fallthru
          _
        // Predicated region
        $region25: #{variational_encoder_forward.1} parent=11 // pred_check
          %p190 = pneg %p138
        $region26: #{variational_encoder_forward.1} parent=11 // pred_check_branch
          %192 = sbr.rel (%p190) target = $region28
        $region27: #{variational_encoder_forward.1} parent=11 // pred_region
          _
        $region28: #{variational_encoder_forward.1} parent=11 // pred_fallthru
          _
      $region12: #{variational_encoder_forward.1} parent=5 // pred_fallthru
        _
      %p193 = scmp.lt.s32.totalorder %s14, 2
      // Predicated region
      $region29: #{variational_encoder_forward.1} parent=5 // pred_check
        %p194 = pneg %p193
      $region30: #{variational_encoder_forward.1} parent=5 // pred_check_branch
        %196 = sbr.rel (%p194) target = $region32
      $region31: #{variational_encoder_forward.1} parent=5 // pred_region
        // Predicated region
        $region33: #{variational_encoder_forward.1} parent=31 // pred_check
          %p197 = pneg %p48
        $region34: #{variational_encoder_forward.1} parent=31 // pred_check_branch
          %199 = sbr.rel (%p197) target = $region36
        $region35: #{variational_encoder_forward.1} parent=31 // pred_region
          %p200 = scmp.lt.s32.totalorder %s21, 1
          %s201 = scalar_select %p200, %s21, 1
          %p202 = scmp.lt.s32.totalorder %s22, 0
          %s203 = scalar_select %p202, %s22, 0
          %s204 = smul.addr %s203, 5
          %s205 = smul.addr %s201, 5
          %s206 = sadd.s32 %s204, %s205
          %s207 = smul.addr %s206, 4
          %s208 = scalar_lea.vmem %s0, %s207
        $region36: #{variational_encoder_forward.1} parent=31 // pred_fallthru
          _
      $region32: #{variational_encoder_forward.1} parent=5 // pred_fallthru
        _
      %p209 = scmp.le.s32.totalorder 1, %s14
      %p210 = scmp.lt.s32.totalorder %s14, 3
      %p211 = pnand %p209, %p210
      %p212 = pneg %p211
      // Predicated region
      $region37: #{variational_encoder_forward.1} parent=5 // pred_check
        _
      $region38: #{variational_encoder_forward.1} parent=5 // pred_check_branch
        %214 = sbr.rel (%p211) target = $region40
      $region39: #{variational_encoder_forward.1} parent=5 // pred_region
        %s215 = ssub.s32 %s14, 1
        %p216 = scmp.lt.s32.totalorder %s23, 1
        %s217 = scalar_select %p216, %s23, 1
        %p218 = scmp.lt.s32.totalorder %s24, 0
        %s219 = scalar_select %p218, %s24, 0
        %s220 = smul.addr %s219, 5
        %s221 = smul.addr %s217, 5
        %s222 = sadd.s32 %s220, %s221
        %s223 = smul.addr %s222, 4
        %s224 = scalar_lea.vmem %s0, %s223
        %p225 = pneg %p54
        %p226 = pneg %p51
        %p227 = pneg %p75
        %p228 = pneg %p72
        %p229 = pneg %p96
        %p230 = pneg %p93
        %p231 = pneg %p117
        %p232 = pneg %p114
        %p233 = pneg %p138
        %p234 = pneg %p135
        %p235 = pneg %p166
        %p236 = pneg %p163
        %s237 = sand.u32 %s153, 1
        %s238 = scalar_lea.sflag [#allocation3], %s237
        %s239 = sand.u32 %s153, 1
        %s240 = smul.addr %s239, 64
        %s241 = scalar_lea.vmem [#allocation2], %s240
        %p242 = scmp.lt.s32.totalorder %s23, 1
        %s243 = scalar_select %p242, %s23, 1
        %p244 = scmp.lt.s32.totalorder %s24, 0
        %s245 = scalar_select %p244, %s24, 0
        %s246 = smul.addr %s245, 5
        %s247 = smul.addr %s243, 5
        %s248 = sadd.s32 %s246, %s247
        %s249 = smul.addr %s248, 4
        %s250 = scalar_lea.vmem %s0, %s249
        %s251 = smul.u32 4, %s24
        %v253 = vld [vmem:[%s250] sm:$0xff]
        %v254 = vld [vmem:[%s250 + $0x8] sm:$0xff]
        %v255 = vld [vmem:[%s250 + $0x10] sm:$0xf]
        %v259 = vunpack.c.l.b16 %v253
        %v260 = vunpack.c.h.b16 %v253
        %v261 = vunpack.c.l.b16 %v254
        %v262 = vunpack.c.h.b16 %v254
        %v263 = vunpack.c.l.b16 %v255
        %v264 = vpack.c.b16 %v259, %v259
        %v265 = vpack.c.b16 %v260, %v260
        %v266 = vpack.c.b16 %v261, %v261
        %v267 = vpack.c.b16 %v262, %v262
        %v268 = vpack.c.b16 %v263, %v263
        %269 = vrot.lane.b32.xlu0 %v264, 127
        %v270 = vpop.permute.xlu0 %269
        %271 = vrot.lane.b32.xlu0 %v265, 127
        %v272 = vpop.permute.xlu0 %271
        %273 = vrot.lane.b32.xlu0 %v266, 127
        %v274 = vpop.permute.xlu0 %273
        %275 = vrot.lane.b32.xlu0 %v267, 127
        %v276 = vpop.permute.xlu0 %275
        %277 = vrot.lane.b32.xlu0 %v268, 127
        %v278 = vpop.permute.xlu0 %277
        %vm279 = vcmask 1039360
        %v280 = vsel %vm279, %v270, %v272
        %v281 = vsel %vm279, %v272, %v274
        %v282 = vsel %vm279, %v274, %v276
        %v283 = vsel %vm279, %v276, %v278
        %284 = vrot.lane.b32.xlu0 %v264, 126
        %v285 = vpop.permute.xlu0 %284
        %286 = vrot.lane.b32.xlu0 %v265, 126
        %v287 = vpop.permute.xlu0 %286
        %288 = vrot.lane.b32.xlu0 %v266, 126
        %v289 = vpop.permute.xlu0 %288
        %290 = vrot.lane.b32.xlu0 %v267, 126
        %v291 = vpop.permute.xlu0 %290
        %292 = vrot.lane.b32.xlu0 %v268, 126
        %v293 = vpop.permute.xlu0 %292
        %vm294 = vcmask 1031168
        %v295 = vsel %vm294, %v285, %v287
        %v296 = vsel %vm294, %v287, %v289
        %v297 = vsel %vm294, %v289, %v291
        %v298 = vsel %vm294, %v291, %v293
        %vm299 = vcmask 1043456
        %v302 = vsel %vm299, %v264, %v280
        %v306 = vsel %vm299, %v265, %v281
        %v310 = vsel %vm299, %v266, %v282
        %v314 = vsel %vm299, %v267, %v283
        %v318 = vsel %vm299, %v268, %v278
        %v320 = vld [vmem:[%s1] sm:$0xf]
        %v321 = vld [vmem:[%s1 + $0x4] sm:$0xf]
        %v322 = vld [vmem:[%s1 + $0x8] sm:$0xf]
        %v323 = vld [vmem:[%s1 + $0xc] sm:$0xf]
        %v324 = vld [vmem:[%s1 + $0x10] sm:$0xf]
        %v325 = vld [vmem:[%s1 + $0x14] sm:$0xf]
        %v326 = vld [vmem:[%s1 + $0x18] sm:$0xf]
        %v327 = vld [vmem:[%s1 + $0x1c] sm:$0xf]
        %v328 = vld [vmem:[%s1 + $0x20] sm:$0xf]
        %v329 = vld [vmem:[%s1 + $0x24] sm:$0xf]
        %v330 = vld [vmem:[%s1 + $0x28] sm:$0xf]
        %v331 = vld [vmem:[%s1 + $0x2c] sm:$0xf]
        %v332 = vld [vmem:[%s1 + $0x30] sm:$0xf]
        %v333 = vld [vmem:[%s1 + $0x34] sm:$0xf]
        %v334 = vld [vmem:[%s1 + $0x38] sm:$0xf]
        %v335 = vld [vmem:[%s1 + $0x3c] sm:$0xf]
        %v336 = vld [vmem:[%s2] sm:$0xff]
        %v337 = vld [vmem:[%s2 + $0x8] sm:$0xff]
        %v338 = vld [vmem:[%s2 + $0x10] sm:$0xff]
        %v339 = vld [vmem:[%s2 + $0x18] sm:$0xff]
        %v340 = vld [vmem:[%s2 + $0x20] sm:$0xff]
        %v341 = vld [vmem:[%s2 + $0x28] sm:$0xff]
        %v342 = vld [vmem:[%s2 + $0x30] sm:$0xff]
        %v343 = vld [vmem:[%s2 + $0x38] sm:$0xff]
        %v344 = vld [vmem:[%s2 + $0x40] sm:$0xff]
        %v345 = vld [vmem:[%s2 + $0x48] sm:$0xff]
        %v346 = vld [vmem:[%s2 + $0x50] sm:$0xff]
        %v347 = vld [vmem:[%s2 + $0x58] sm:$0xff]
        %v348 = vld [vmem:[%s2 + $0x60] sm:$0xff]
        %v349 = vld [vmem:[%s2 + $0x68] sm:$0xff]
        %v350 = vld [vmem:[%s2 + $0x70] sm:$0xff]
        %v351 = vld [vmem:[%s2 + $0x78] sm:$0xff]
        %353 = vset.pattern.permute.xlu0 0
        %354 = vperm.xlu0 %353, %v336
        %v355 = vpop.permute.xlu0 %354
        %358 = vset.pattern.permute.xlu0 0
        %359 = vperm.xlu0 %358, %v337
        %v360 = vpop.permute.xlu0 %359
        %363 = vset.pattern.permute.xlu0 0
        %364 = vperm.xlu0 %363, %v338
        %v365 = vpop.permute.xlu0 %364
        %368 = vset.pattern.permute.xlu0 0
        %369 = vperm.xlu0 %368, %v339
        %v370 = vpop.permute.xlu0 %369
        %373 = vset.pattern.permute.xlu0 0
        %374 = vperm.xlu0 %373, %v340
        %v375 = vpop.permute.xlu0 %374
        %378 = vset.pattern.permute.xlu0 0
        %379 = vperm.xlu0 %378, %v341
        %v380 = vpop.permute.xlu0 %379
        %383 = vset.pattern.permute.xlu0 0
        %384 = vperm.xlu0 %383, %v342
        %v385 = vpop.permute.xlu0 %384
        %388 = vset.pattern.permute.xlu0 0
        %389 = vperm.xlu0 %388, %v343
        %v390 = vpop.permute.xlu0 %389
        %393 = vset.pattern.permute.xlu0 0
        %394 = vperm.xlu0 %393, %v344
        %v395 = vpop.permute.xlu0 %394
        %398 = vset.pattern.permute.xlu0 0
        %399 = vperm.xlu0 %398, %v345
        %v400 = vpop.permute.xlu0 %399
        %403 = vset.pattern.permute.xlu0 0
        %404 = vperm.xlu0 %403, %v346
        %v405 = vpop.permute.xlu0 %404
        %408 = vset.pattern.permute.xlu0 0
        %409 = vperm.xlu0 %408, %v347
        %v410 = vpop.permute.xlu0 %409
        %413 = vset.pattern.permute.xlu0 0
        %414 = vperm.xlu0 %413, %v348
        %v415 = vpop.permute.xlu0 %414
        %418 = vset.pattern.permute.xlu0 0
        %419 = vperm.xlu0 %418, %v349
        %v420 = vpop.permute.xlu0 %419
        %423 = vset.pattern.permute.xlu0 0
        %424 = vperm.xlu0 %423, %v350
        %v425 = vpop.permute.xlu0 %424
        %428 = vset.pattern.permute.xlu0 0
        %429 = vperm.xlu0 %428, %v351
        %v430 = vpop.permute.xlu0 %429
        %v448 = vunpack.c.l.b16 %v320
        %v449 = vunpack.c.l.b16 %v321
        %v450 = vunpack.c.l.b16 %v322
        %v451 = vunpack.c.l.b16 %v323
        %v452 = vunpack.c.l.b16 %v324
        %v453 = vunpack.c.l.b16 %v325
        %v454 = vunpack.c.l.b16 %v326
        %v455 = vunpack.c.l.b16 %v327
        %v456 = vunpack.c.l.b16 %v328
        %v457 = vunpack.c.l.b16 %v329
        %v458 = vunpack.c.l.b16 %v330
        %v459 = vunpack.c.l.b16 %v331
        %v460 = vunpack.c.l.b16 %v332
        %v461 = vunpack.c.l.b16 %v333
        %v462 = vunpack.c.l.b16 %v334
        %v463 = vunpack.c.l.b16 %v335
        %v464 = vpack.c.b16 %v449, %v448
        %v465 = vpack.c.b16 %v451, %v450
        %v466 = vpack.c.b16 %v453, %v452
        %v467 = vpack.c.b16 %v455, %v454
        %v468 = vpack.c.b16 %v457, %v456
        %v469 = vpack.c.b16 %v459, %v458
        %v470 = vpack.c.b16 %v461, %v460
        %v471 = vpack.c.b16 %v463, %v462
        %vm472 = vcmask 195584
        %v474 = vsel %vm472, %v464, 0
        %v477 = vsel %vm472, %v465, 0
        %v480 = vsel %vm472, %v466, 0
        %v483 = vsel %vm472, %v467, 0
        %v486 = vsel %vm472, %v468, 0
        %v489 = vsel %vm472, %v469, 0
        %v492 = vsel %vm472, %v470, 0
        %v495 = vsel %vm472, %v471, 0
        %v498 = vsel %vm299, %v295, 0
        %v501 = vsel %vm299, %v296, 0
        %v504 = vsel %vm299, %v297, 0
        %v507 = vsel %vm299, %v298, 0
        %v510 = vsel %vm299, %v293, 0
        %512 = vmatprep.subr.bf16.mxu0 %v306
        %513 = vmatpush1.bf16.msra.mxu0 %v302
        %514 = vmatprep.subr.bf16.mxu0 %v501
        %515 = vmatpush1.bf16.msra.mxu0 %v498
        %516 = vmatprep.subr.bf16.mxu0 0
        %517 = vmatpush1.bf16.msra.mxu0 0
        %518 = vmatprep.subr.bf16.mxu0 0
        %519 = vmatpush1.bf16.msra.mxu0 0
        %520 = vmatprep.subr.bf16.mxu0 0
        %521 = vmatpush1.bf16.msra.mxu0 0
        %522 = vmatprep.subr.bf16.mxu0 0
        %523 = vmatpush1.bf16.msra.mxu0 0
        %524 = vmatprep.subr.bf16.mxu0 0
        %525 = vmatpush1.bf16.msra.mxu0 0
        %526 = vmatprep.subr.bf16.mxu0 0
        %527 = vmatpush1.bf16.msra.mxu0 0
        %528 = vmatprep.subr.bf16.mxu0 0
        %529 = vmatpush1.bf16.msra.mxu0 0
        %530 = vmatprep.subr.bf16.mxu0 0
        %531 = vmatpush1.bf16.msra.mxu0 0
        %532 = vmatprep.subr.bf16.mxu0 0
        %533 = vmatpush1.bf16.msra.mxu0 0
        %534 = vmatprep.subr.bf16.mxu0 0
        %535 = vmatpush1.bf16.msra.mxu0 0
        %536 = vmatprep.subr.bf16.mxu0 0
        %537 = vmatpush1.bf16.msra.mxu0 0
        %538 = vmatprep.subr.bf16.mxu0 0
        %539 = vmatpush1.bf16.msra.mxu0 0
        %540 = vmatprep.subr.bf16.mxu0 0
        %541 = vmatpush1.bf16.msra.mxu0 0
        %542 = vmatprep.subr.bf16.mxu0 0
        %543 = vmatpush1.bf16.msra.mxu0 0
        %544 = vmatprep.mubr.bf16.mxu0 0
        %545 = vmatmul.mubr.bf16.gmra.mrb[0].mxu0 %v474
        %v546 = vpop.f32.mrb[0].mxu0
        %v547 = vadd.f32 %v355, %v546
        %v548 = vpop.f32.mrb[0].mxu0
        %v549 = vadd.f32 %v355, %v548
        %v550 = vpop.f32.mrb[0].mxu0
        %v551 = vadd.f32 %v360, %v550
        %v552 = vpop.f32.mrb[0].mxu0
        %v553 = vadd.f32 %v360, %v552
        %554 = vmatprep.mubr.bf16.mxu0 0
        %555 = vmatmul.mubr.bf16.gmra.mrb[0].mxu0 %v477
        %v556 = vpop.f32.mrb[0].mxu0
        %v557 = vadd.f32 %v365, %v556
        %v558 = vpop.f32.mrb[0].mxu0
        %v559 = vadd.f32 %v365, %v558
        %v560 = vpop.f32.mrb[0].mxu0
        %v561 = vadd.f32 %v370, %v560
        %v562 = vpop.f32.mrb[0].mxu0
        %v563 = vadd.f32 %v370, %v562
        %564 = vmatprep.mubr.bf16.mxu0 0
        %565 = vmatmul.mubr.bf16.gmra.mrb[0].mxu0 %v480
        %v566 = vpop.f32.mrb[0].mxu0
        %v567 = vadd.f32 %v375, %v566
        %v568 = vpop.f32.mrb[0].mxu0
        %v569 = vadd.f32 %v375, %v568
        %v570 = vpop.f32.mrb[0].mxu0
        %v571 = vadd.f32 %v380, %v570
        %v572 = vpop.f32.mrb[0].mxu0
        %v573 = vadd.f32 %v380, %v572
        %574 = vmatprep.mubr.bf16.mxu0 0
        %575 = vmatmul.mubr.bf16.gmra.mrb[0].mxu0 %v483
        %v576 = vpop.f32.mrb[0].mxu0
        %v577 = vadd.f32 %v385, %v576
        %v578 = vpop.f32.mrb[0].mxu0
        %v579 = vadd.f32 %v385, %v578
        %v580 = vpop.f32.mrb[0].mxu0
        %v581 = vadd.f32 %v390, %v580
        %v582 = vpop.f32.mrb[0].mxu0
        %v583 = vadd.f32 %v390, %v582
        %584 = vmatprep.mubr.bf16.mxu0 0
        %585 = vmatmul.mubr.bf16.gmra.mrb[0].mxu0 %v486
        %v586 = vpop.f32.mrb[0].mxu0
        %v587 = vadd.f32 %v395, %v586
        %v588 = vpop.f32.mrb[0].mxu0
        %v589 = vadd.f32 %v395, %v588
        %v590 = vpop.f32.mrb[0].mxu0
        %v591 = vadd.f32 %v400, %v590
        %v592 = vpop.f32.mrb[0].mxu0
        %v593 = vadd.f32 %v400, %v592
        %594 = vmatprep.mubr.bf16.mxu0 0
        %595 = vmatmul.mubr.bf16.gmra.mrb[0].mxu0 %v489
        %v596 = vpop.f32.mrb[0].mxu0
        %v597 = vadd.f32 %v405, %v596
        %v598 = vpop.f32.mrb[0].mxu0
        %v599 = vadd.f32 %v405, %v598
        %v600 = vpop.f32.mrb[0].mxu0
        %v601 = vadd.f32 %v410, %v600
        %v602 = vpop.f32.mrb[0].mxu0
        %v603 = vadd.f32 %v410, %v602
        %604 = vmatprep.mubr.bf16.mxu0 0
        %605 = vmatmul.mubr.bf16.gmra.mrb[0].mxu0 %v492
        %v606 = vpop.f32.mrb[0].mxu0
        %v607 = vadd.f32 %v415, %v606
        %v608 = vpop.f32.mrb[0].mxu0
        %v609 = vadd.f32 %v415, %v608
        %v610 = vpop.f32.mrb[0].mxu0
        %v611 = vadd.f32 %v420, %v610
        %v612 = vpop.f32.mrb[0].mxu0
        %v613 = vadd.f32 %v420, %v612
        %614 = vmatprep.mubr.bf16.mxu0 0
        %615 = vmatmul.mubr.bf16.gmra.mrb[0].mxu0 %v495
        %v616 = vpop.f32.mrb[0].mxu0
        %v617 = vadd.f32 %v425, %v616
        %v618 = vpop.f32.mrb[0].mxu0
        %v619 = vadd.f32 %v425, %v618
        %v620 = vpop.f32.mrb[0].mxu0
        %v621 = vadd.f32 %v430, %v620
        %v622 = vpop.f32.mrb[0].mxu0
        %v623 = vadd.f32 %v430, %v622
        %624 = vdwg.mxu0
        %625 = vmatprep.subr.bf16.mxu0 %v314
        %626 = vmatpush1.bf16.msra.mxu0 %v310
        %627 = vmatprep.subr.bf16.mxu0 %v507
        %628 = vmatpush1.bf16.msra.mxu0 %v504
        %629 = vmatprep.subr.bf16.mxu0 0
        %630 = vmatpush1.bf16.msra.mxu0 0
        %631 = vmatprep.subr.bf16.mxu0 0
        %632 = vmatpush1.bf16.msra.mxu0 0
        %633 = vmatprep.subr.bf16.mxu0 0
        %634 = vmatpush1.bf16.msra.mxu0 0
        %635 = vmatprep.subr.bf16.mxu0 0
        %636 = vmatpush1.bf16.msra.mxu0 0
        %637 = vmatprep.subr.bf16.mxu0 0
        %638 = vmatpush1.bf16.msra.mxu0 0
        %639 = vmatprep.subr.bf16.mxu0 0
        %640 = vmatpush1.bf16.msra.mxu0 0
        %641 = vmatprep.subr.bf16.mxu0 0
        %642 = vmatpush1.bf16.msra.mxu0 0
        %643 = vmatprep.subr.bf16.mxu0 0
        %644 = vmatpush1.bf16.msra.mxu0 0
        %645 = vmatprep.subr.bf16.mxu0 0
        %646 = vmatpush1.bf16.msra.mxu0 0
        %647 = vmatprep.subr.bf16.mxu0 0
        %648 = vmatpush1.bf16.msra.mxu0 0
        %649 = vmatprep.subr.bf16.mxu0 0
        %650 = vmatpush1.bf16.msra.mxu0 0
        %651 = vmatprep.subr.bf16.mxu0 0
        %652 = vmatpush1.bf16.msra.mxu0 0
        %653 = vmatprep.subr.bf16.mxu0 0
        %654 = vmatpush1.bf16.msra.mxu0 0
        %655 = vmatprep.subr.bf16.mxu0 0
        %656 = vmatpush1.bf16.msra.mxu0 0
        %657 = vmatprep.mubr.bf16.mxu0 0
        %658 = vmatmul.mubr.bf16.gmra.mrb[0].mxu0 %v474
        %v659 = vpop.f32.mrb[0].mxu0
        %v660 = vadd.f32 %v355, %v659
        %v661 = vpop.f32.mrb[0].mxu0
        %v662 = vadd.f32 %v355, %v661
        %v663 = vpop.f32.mrb[0].mxu0
        %v664 = vadd.f32 %v360, %v663
        %v665 = vpop.f32.mrb[0].mxu0
        %v666 = vadd.f32 %v360, %v665
        %667 = vmatprep.mubr.bf16.mxu0 0
        %668 = vmatmul.mubr.bf16.gmra.mrb[0].mxu0 %v477
        %v669 = vpop.f32.mrb[0].mxu0
        %v670 = vadd.f32 %v365, %v669
        %v671 = vpop.f32.mrb[0].mxu0
        %v672 = vadd.f32 %v365, %v671
        %v673 = vpop.f32.mrb[0].mxu0
        %v674 = vadd.f32 %v370, %v673
        %v675 = vpop.f32.mrb[0].mxu0
        %v676 = vadd.f32 %v370, %v675
        %677 = vmatprep.mubr.bf16.mxu0 0
        %678 = vmatmul.mubr.bf16.gmra.mrb[0].mxu0 %v480
        %v679 = vpop.f32.mrb[0].mxu0
        %v680 = vadd.f32 %v375, %v679
        %v681 = vpop.f32.mrb[0].mxu0
        %v682 = vadd.f32 %v375, %v681
        %v683 = vpop.f32.mrb[0].mxu0
        %v684 = vadd.f32 %v380, %v683
        %v685 = vpop.f32.mrb[0].mxu0
        %v686 = vadd.f32 %v380, %v685
        %687 = vmatprep.mubr.bf16.mxu0 0
        %688 = vmatmul.mubr.bf16.gmra.mrb[0].mxu0 %v483
        %v689 = vpop.f32.mrb[0].mxu0
        %v690 = vadd.f32 %v385, %v689
        %v691 = vpop.f32.mrb[0].mxu0
        %v692 = vadd.f32 %v385, %v691
        %v693 = vpop.f32.mrb[0].mxu0
        %v694 = vadd.f32 %v390, %v693
        %v695 = vpop.f32.mrb[0].mxu0
        %v696 = vadd.f32 %v390, %v695
        %697 = vmatprep.mubr.bf16.mxu0 0
        %698 = vmatmul.mubr.bf16.gmra.mrb[0].mxu0 %v486
        %v699 = vpop.f32.mrb[0].mxu0
        %v700 = vadd.f32 %v395, %v699
        %v701 = vpop.f32.mrb[0].mxu0
        %v702 = vadd.f32 %v395, %v701
        %v703 = vpop.f32.mrb[0].mxu0
        %v704 = vadd.f32 %v400, %v703
        %v705 = vpop.f32.mrb[0].mxu0
        %v706 = vadd.f32 %v400, %v705
        %707 = vmatprep.mubr.bf16.mxu0 0
        %708 = vmatmul.mubr.bf16.gmra.mrb[0].mxu0 %v489
        %v709 = vpop.f32.mrb[0].mxu0
        %v710 = vadd.f32 %v405, %v709
        %v711 = vpop.f32.mrb[0].mxu0
        %v712 = vadd.f32 %v405, %v711
        %v713 = vpop.f32.mrb[0].mxu0
        %v714 = vadd.f32 %v410, %v713
        %v715 = vpop.f32.mrb[0].mxu0
        %v716 = vadd.f32 %v410, %v715
        %717 = vmatprep.mubr.bf16.mxu0 0
        %718 = vmatmul.mubr.bf16.gmra.mrb[0].mxu0 %v492
        %v719 = vpop.f32.mrb[0].mxu0
        %v720 = vadd.f32 %v415, %v719
        %v721 = vpop.f32.mrb[0].mxu0
        %v722 = vadd.f32 %v415, %v721
        %v723 = vpop.f32.mrb[0].mxu0
        %v724 = vadd.f32 %v420, %v723
        %v725 = vpop.f32.mrb[0].mxu0
        %v726 = vadd.f32 %v420, %v725
        %727 = vmatprep.mubr.bf16.mxu0 0
        %728 = vmatmul.mubr.bf16.gmra.mrb[0].mxu0 %v495
        %v729 = vpop.f32.mrb[0].mxu0
        %v730 = vadd.f32 %v425, %v729
        %v731 = vpop.f32.mrb[0].mxu0
        %v732 = vadd.f32 %v425, %v731
        %v733 = vpop.f32.mrb[0].mxu0
        %v734 = vadd.f32 %v430, %v733
        %v735 = vpop.f32.mrb[0].mxu0
        %v736 = vadd.f32 %v430, %v735
        %737 = vdwg.mxu0
        %738 = vmatprep.subr.bf16.mxu0 0
        %739 = vmatpush1.bf16.msra.mxu0 %v318
        %740 = vmatprep.subr.bf16.mxu0 0
        %741 = vmatpush1.bf16.msra.mxu0 %v510
        %742 = vmatprep.subr.bf16.mxu0 0
        %743 = vmatpush1.bf16.msra.mxu0 0
        %744 = vmatprep.subr.bf16.mxu0 0
        %745 = vmatpush1.bf16.msra.mxu0 0
        %746 = vmatprep.subr.bf16.mxu0 0
        %747 = vmatpush1.bf16.msra.mxu0 0
        %748 = vmatprep.subr.bf16.mxu0 0
        %749 = vmatpush1.bf16.msra.mxu0 0
        %750 = vmatprep.subr.bf16.mxu0 0
        %751 = vmatpush1.bf16.msra.mxu0 0
        %752 = vmatprep.subr.bf16.mxu0 0
        %753 = vmatpush1.bf16.msra.mxu0 0
        %754 = vmatprep.subr.bf16.mxu0 0
        %755 = vmatpush1.bf16.msra.mxu0 0
        %756 = vmatprep.subr.bf16.mxu0 0
        %757 = vmatpush1.bf16.msra.mxu0 0
        %758 = vmatprep.subr.bf16.mxu0 0
        %759 = vmatpush1.bf16.msra.mxu0 0
        %760 = vmatprep.subr.bf16.mxu0 0
        %761 = vmatpush1.bf16.msra.mxu0 0
        %762 = vmatprep.subr.bf16.mxu0 0
        %763 = vmatpush1.bf16.msra.mxu0 0
        %764 = vmatprep.subr.bf16.mxu0 0
        %765 = vmatpush1.bf16.msra.mxu0 0
        %766 = vmatprep.subr.bf16.mxu0 0
        %767 = vmatpush1.bf16.msra.mxu0 0
        %768 = vmatprep.subr.bf16.mxu0 0
        %769 = vmatpush1.bf16.msra.mxu0 0
        %770 = vmatprep.mubr.bf16.mxu0 0
        %771 = vmatmul.mubr.bf16.gmra.mrb[0].mxu0 %v474
        %v772 = vpop.f32.mrb[0].mxu0
        %v773 = vadd.f32 %v355, %v772
        %v774 = vpop.f32.mrb[0].mxu0
        %v775 = vpop.f32.mrb[0].mxu0
        %v776 = vadd.f32 %v360, %v775
        %v777 = vpop.f32.mrb[0].mxu0
        %778 = vmatprep.mubr.bf16.mxu0 0
        %779 = vmatmul.mubr.bf16.gmra.mrb[0].mxu0 %v477
        %v780 = vpop.f32.mrb[0].mxu0
        %v781 = vadd.f32 %v365, %v780
        %v782 = vpop.f32.mrb[0].mxu0
        %v783 = vpop.f32.mrb[0].mxu0
        %v784 = vadd.f32 %v370, %v783
        %v785 = vpop.f32.mrb[0].mxu0
        %786 = vmatprep.mubr.bf16.mxu0 0
        %787 = vmatmul.mubr.bf16.gmra.mrb[0].mxu0 %v480
        %v788 = vpop.f32.mrb[0].mxu0
        %v789 = vadd.f32 %v375, %v788
        %v790 = vpop.f32.mrb[0].mxu0
        %v791 = vpop.f32.mrb[0].mxu0
        %v792 = vadd.f32 %v380, %v791
        %v793 = vpop.f32.mrb[0].mxu0
        %794 = vmatprep.mubr.bf16.mxu0 0
        %795 = vmatmul.mubr.bf16.gmra.mrb[0].mxu0 %v483
        %v796 = vpop.f32.mrb[0].mxu0
        %v797 = vadd.f32 %v385, %v796
        %v798 = vpop.f32.mrb[0].mxu0
        %v799 = vpop.f32.mrb[0].mxu0
        %v800 = vadd.f32 %v390, %v799
        %v801 = vpop.f32.mrb[0].mxu0
        %802 = vmatprep.mubr.bf16.mxu0 0
        %803 = vmatmul.mubr.bf16.gmra.mrb[0].mxu0 %v486
        %v804 = vpop.f32.mrb[0].mxu0
        %v805 = vadd.f32 %v395, %v804
        %v806 = vpop.f32.mrb[0].mxu0
        %v807 = vpop.f32.mrb[0].mxu0
        %v808 = vadd.f32 %v400, %v807
        %v809 = vpop.f32.mrb[0].mxu0
        %810 = vmatprep.mubr.bf16.mxu0 0
        %811 = vmatmul.mubr.bf16.gmra.mrb[0].mxu0 %v489
        %v812 = vpop.f32.mrb[0].mxu0
        %v813 = vadd.f32 %v405, %v812
        %v814 = vpop.f32.mrb[0].mxu0
        %v815 = vpop.f32.mrb[0].mxu0
        %v816 = vadd.f32 %v410, %v815
        %v817 = vpop.f32.mrb[0].mxu0
        %818 = vmatprep.mubr.bf16.mxu0 0
        %819 = vmatmul.mubr.bf16.gmra.mrb[0].mxu0 %v492
        %v820 = vpop.f32.mrb[0].mxu0
        %v821 = vadd.f32 %v415, %v820
        %v822 = vpop.f32.mrb[0].mxu0
        %v823 = vpop.f32.mrb[0].mxu0
        %v824 = vadd.f32 %v420, %v823
        %v825 = vpop.f32.mrb[0].mxu0
        %826 = vmatprep.mubr.bf16.mxu0 0
        %827 = vmatmul.mubr.bf16.gmra.mrb[0].mxu0 %v495
        %v828 = vpop.f32.mrb[0].mxu0
        %v829 = vadd.f32 %v425, %v828
        %v830 = vpop.f32.mrb[0].mxu0
        %v831 = vpop.f32.mrb[0].mxu0
        %v832 = vadd.f32 %v430, %v831
        %v833 = vpop.f32.mrb[0].mxu0
        %834 = vdwg.mxu0
        %vm835 = vcmp.ge.f32.partialorder %v547, 0.0
        %vm836 = vcmp.ge.f32.partialorder %v549, 0.0
        %vm837 = vcmp.ge.f32.partialorder %v660, 0.0
        %vm838 = vcmp.ge.f32.partialorder %v662, 0.0
        %vm839 = vcmp.ge.f32.partialorder %v773, 0.0
        %vm840 = vcmp.ge.f32.partialorder %v551, 0.0
        %vm841 = vcmp.ge.f32.partialorder %v553, 0.0
        %vm842 = vcmp.ge.f32.partialorder %v664, 0.0
        %vm843 = vcmp.ge.f32.partialorder %v666, 0.0
        %vm844 = vcmp.ge.f32.partialorder %v776, 0.0
        %vm845 = vcmp.ge.f32.partialorder %v557, 0.0
        %vm846 = vcmp.ge.f32.partialorder %v559, 0.0
        %vm847 = vcmp.ge.f32.partialorder %v670, 0.0
        %vm848 = vcmp.ge.f32.partialorder %v672, 0.0
        %vm849 = vcmp.ge.f32.partialorder %v781, 0.0
        %vm850 = vcmp.ge.f32.partialorder %v561, 0.0
        %vm851 = vcmp.ge.f32.partialorder %v563, 0.0
        %vm852 = vcmp.ge.f32.partialorder %v674, 0.0
        %vm853 = vcmp.ge.f32.partialorder %v676, 0.0
        %vm854 = vcmp.ge.f32.partialorder %v784, 0.0
        %vm855 = vcmp.ge.f32.partialorder %v567, 0.0
        %vm856 = vcmp.ge.f32.partialorder %v569, 0.0
        %vm857 = vcmp.ge.f32.partialorder %v680, 0.0
        %vm858 = vcmp.ge.f32.partialorder %v682, 0.0
        %vm859 = vcmp.ge.f32.partialorder %v789, 0.0
        %vm860 = vcmp.ge.f32.partialorder %v571, 0.0
        %vm861 = vcmp.ge.f32.partialorder %v573, 0.0
        %vm862 = vcmp.ge.f32.partialorder %v684, 0.0
        %vm863 = vcmp.ge.f32.partialorder %v686, 0.0
        %vm864 = vcmp.ge.f32.partialorder %v792, 0.0
        %vm865 = vcmp.ge.f32.partialorder %v577, 0.0
        %vm866 = vcmp.ge.f32.partialorder %v579, 0.0
        %vm867 = vcmp.ge.f32.partialorder %v690, 0.0
        %vm868 = vcmp.ge.f32.partialorder %v692, 0.0
        %vm869 = vcmp.ge.f32.partialorder %v797, 0.0
        %vm870 = vcmp.ge.f32.partialorder %v581, 0.0
        %vm871 = vcmp.ge.f32.partialorder %v583, 0.0
        %vm872 = vcmp.ge.f32.partialorder %v694, 0.0
        %vm873 = vcmp.ge.f32.partialorder %v696, 0.0
        %vm874 = vcmp.ge.f32.partialorder %v800, 0.0
        %vm875 = vcmp.ge.f32.partialorder %v587, 0.0
        %vm876 = vcmp.ge.f32.partialorder %v589, 0.0
        %vm877 = vcmp.ge.f32.partialorder %v700, 0.0
        %vm878 = vcmp.ge.f32.partialorder %v702, 0.0
        %vm879 = vcmp.ge.f32.partialorder %v805, 0.0
        %vm880 = vcmp.ge.f32.partialorder %v591, 0.0
        %vm881 = vcmp.ge.f32.partialorder %v593, 0.0
        %vm882 = vcmp.ge.f32.partialorder %v704, 0.0
        %vm883 = vcmp.ge.f32.partialorder %v706, 0.0
        %vm884 = vcmp.ge.f32.partialorder %v808, 0.0
        %vm885 = vcmp.ge.f32.partialorder %v597, 0.0
        %vm886 = vcmp.ge.f32.partialorder %v599, 0.0
        %vm887 = vcmp.ge.f32.partialorder %v710, 0.0
        %vm888 = vcmp.ge.f32.partialorder %v712, 0.0
        %vm889 = vcmp.ge.f32.partialorder %v813, 0.0
        %vm890 = vcmp.ge.f32.partialorder %v601, 0.0
        %vm891 = vcmp.ge.f32.partialorder %v603, 0.0
        %vm892 = vcmp.ge.f32.partialorder %v714, 0.0
        %vm893 = vcmp.ge.f32.partialorder %v716, 0.0
        %vm894 = vcmp.ge.f32.partialorder %v816, 0.0
        %vm895 = vcmp.ge.f32.partialorder %v607, 0.0
        %vm896 = vcmp.ge.f32.partialorder %v609, 0.0
        %vm897 = vcmp.ge.f32.partialorder %v720, 0.0
        %vm898 = vcmp.ge.f32.partialorder %v722, 0.0
        %vm899 = vcmp.ge.f32.partialorder %v821, 0.0
        %vm900 = vcmp.ge.f32.partialorder %v611, 0.0
        %vm901 = vcmp.ge.f32.partialorder %v613, 0.0
        %vm902 = vcmp.ge.f32.partialorder %v724, 0.0
        %vm903 = vcmp.ge.f32.partialorder %v726, 0.0
        %vm904 = vcmp.ge.f32.partialorder %v824, 0.0
        %vm905 = vcmp.ge.f32.partialorder %v617, 0.0
        %vm906 = vcmp.ge.f32.partialorder %v619, 0.0
        %vm907 = vcmp.ge.f32.partialorder %v730, 0.0
        %vm908 = vcmp.ge.f32.partialorder %v732, 0.0
        %vm909 = vcmp.ge.f32.partialorder %v829, 0.0
        %vm910 = vcmp.ge.f32.partialorder %v621, 0.0
        %vm911 = vcmp.ge.f32.partialorder %v623, 0.0
        %vm912 = vcmp.ge.f32.partialorder %v734, 0.0
        %vm913 = vcmp.ge.f32.partialorder %v736, 0.0
        %vm914 = vcmp.ge.f32.partialorder %v832, 0.0
        %v915 = vmul.f32 %v547, 0.2
        %v916 = vmul.f32 %v549, 0.2
        %v917 = vmul.f32 %v660, 0.2
        %v918 = vmul.f32 %v662, 0.2
        %v919 = vmul.f32 %v773, 0.2
        %v920 = vmul.f32 %v551, 0.2
        %v921 = vmul.f32 %v553, 0.2
        %v922 = vmul.f32 %v664, 0.2
        %v923 = vmul.f32 %v666, 0.2
        %v924 = vmul.f32 %v776, 0.2
        %v925 = vmul.f32 %v557, 0.2
        %v926 = vmul.f32 %v559, 0.2
        %v927 = vmul.f32 %v670, 0.2
        %v928 = vmul.f32 %v672, 0.2
        %v929 = vmul.f32 %v781, 0.2
        %v930 = vmul.f32 %v561, 0.2
        %v931 = vmul.f32 %v563, 0.2
        %v932 = vmul.f32 %v674, 0.2
        %v933 = vmul.f32 %v676, 0.2
        %v934 = vmul.f32 %v784, 0.2
        %v935 = vmul.f32 %v567, 0.2
        %v936 = vmul.f32 %v569, 0.2
        %v937 = vmul.f32 %v680, 0.2
        %v938 = vmul.f32 %v682, 0.2
        %v939 = vmul.f32 %v789, 0.2
        %v940 = vmul.f32 %v571, 0.2
        %v941 = vmul.f32 %v573, 0.2
        %v942 = vmul.f32 %v684, 0.2
        %v943 = vmul.f32 %v686, 0.2
        %v944 = vmul.f32 %v792, 0.2
        %v945 = vmul.f32 %v577, 0.2
        %v946 = vmul.f32 %v579, 0.2
        %v947 = vmul.f32 %v690, 0.2
        %v948 = vmul.f32 %v692, 0.2
        %v949 = vmul.f32 %v797, 0.2
        %v950 = vmul.f32 %v581, 0.2
        %v951 = vmul.f32 %v583, 0.2
        %v952 = vmul.f32 %v694, 0.2
        %v953 = vmul.f32 %v696, 0.2
        %v954 = vmul.f32 %v800, 0.2
        %v955 = vmul.f32 %v587, 0.2
        %v956 = vmul.f32 %v589, 0.2
        %v957 = vmul.f32 %v700, 0.2
        %v958 = vmul.f32 %v702, 0.2
        %v959 = vmul.f32 %v805, 0.2
        %v960 = vmul.f32 %v591, 0.2
        %v961 = vmul.f32 %v593, 0.2
        %v962 = vmul.f32 %v704, 0.2
        %v963 = vmul.f32 %v706, 0.2
        %v964 = vmul.f32 %v808, 0.2
        %v965 = vmul.f32 %v597, 0.2
        %v966 = vmul.f32 %v599, 0.2
        %v967 = vmul.f32 %v710, 0.2
        %v968 = vmul.f32 %v712, 0.2
        %v969 = vmul.f32 %v813, 0.2
        %v970 = vmul.f32 %v601, 0.2
        %v971 = vmul.f32 %v603, 0.2
        %v972 = vmul.f32 %v714, 0.2
        %v973 = vmul.f32 %v716, 0.2
        %v974 = vmul.f32 %v816, 0.2
        %v975 = vmul.f32 %v607, 0.2
        %v976 = vmul.f32 %v609, 0.2
        %v977 = vmul.f32 %v720, 0.2
        %v978 = vmul.f32 %v722, 0.2
        %v979 = vmul.f32 %v821, 0.2
        %v980 = vmul.f32 %v611, 0.2
        %v981 = vmul.f32 %v613, 0.2
        %v982 = vmul.f32 %v724, 0.2
        %v983 = vmul.f32 %v726, 0.2
        %v984 = vmul.f32 %v824, 0.2
        %v985 = vmul.f32 %v617, 0.2
        %v986 = vmul.f32 %v619, 0.2
        %v987 = vmul.f32 %v730, 0.2
        %v988 = vmul.f32 %v732, 0.2
        %v989 = vmul.f32 %v829, 0.2
        %v990 = vmul.f32 %v621, 0.2
        %v991 = vmul.f32 %v623, 0.2
        %v992 = vmul.f32 %v734, 0.2
        %v993 = vmul.f32 %v736, 0.2
        %v994 = vmul.f32 %v832, 0.2
        %v995 = vsel %vm835, %v547, %v915
        %v996 = vsel %vm836, %v549, %v916
        %v997 = vsel %vm837, %v660, %v917
        %v998 = vsel %vm838, %v662, %v918
        %v999 = vsel %vm839, %v773, %v919
        %v1000 = vsel %vm840, %v551, %v920
        %v1001 = vsel %vm841, %v553, %v921
        %v1002 = vsel %vm842, %v664, %v922
        %v1003 = vsel %vm843, %v666, %v923
        %v1004 = vsel %vm844, %v776, %v924
        %v1005 = vsel %vm845, %v557, %v925
        %v1006 = vsel %vm846, %v559, %v926
        %v1007 = vsel %vm847, %v670, %v927
        %v1008 = vsel %vm848, %v672, %v928
        %v1009 = vsel %vm849, %v781, %v929
        %v1010 = vsel %vm850, %v561, %v930
        %v1011 = vsel %vm851, %v563, %v931
        %v1012 = vsel %vm852, %v674, %v932
        %v1013 = vsel %vm853, %v676, %v933
        %v1014 = vsel %vm854, %v784, %v934
        %v1015 = vsel %vm855, %v567, %v935
        %v1016 = vsel %vm856, %v569, %v936
        %v1017 = vsel %vm857, %v680, %v937
        %v1018 = vsel %vm858, %v682, %v938
        %v1019 = vsel %vm859, %v789, %v939
        %v1020 = vsel %vm860, %v571, %v940
        %v1021 = vsel %vm861, %v573, %v941
        %v1022 = vsel %vm862, %v684, %v942
        %v1023 = vsel %vm863, %v686, %v943
        %v1024 = vsel %vm864, %v792, %v944
        %v1025 = vsel %vm865, %v577, %v945
        %v1026 = vsel %vm866, %v579, %v946
        %v1027 = vsel %vm867, %v690, %v947
        %v1028 = vsel %vm868, %v692, %v948
        %v1029 = vsel %vm869, %v797, %v949
        %v1030 = vsel %vm870, %v581, %v950
        %v1031 = vsel %vm871, %v583, %v951
        %v1032 = vsel %vm872, %v694, %v952
        %v1033 = vsel %vm873, %v696, %v953
        %v1034 = vsel %vm874, %v800, %v954
        %v1035 = vsel %vm875, %v587, %v955
        %v1036 = vsel %vm876, %v589, %v956
        %v1037 = vsel %vm877, %v700, %v957
        %v1038 = vsel %vm878, %v702, %v958
        %v1039 = vsel %vm879, %v805, %v959
        %v1040 = vsel %vm880, %v591, %v960
        %v1041 = vsel %vm881, %v593, %v961
        %v1042 = vsel %vm882, %v704, %v962
        %v1043 = vsel %vm883, %v706, %v963
        %v1044 = vsel %vm884, %v808, %v964
        %v1045 = vsel %vm885, %v597, %v965
        %v1046 = vsel %vm886, %v599, %v966
        %v1047 = vsel %vm887, %v710, %v967
        %v1048 = vsel %vm888, %v712, %v968
        %v1049 = vsel %vm889, %v813, %v969
        %v1050 = vsel %vm890, %v601, %v970
        %v1051 = vsel %vm891, %v603, %v971
        %v1052 = vsel %vm892, %v714, %v972
        %v1053 = vsel %vm893, %v716, %v973
        %v1054 = vsel %vm894, %v816, %v974
        %v1055 = vsel %vm895, %v607, %v975
        %v1056 = vsel %vm896, %v609, %v976
        %v1057 = vsel %vm897, %v720, %v977
        %v1058 = vsel %vm898, %v722, %v978
        %v1059 = vsel %vm899, %v821, %v979
        %v1060 = vsel %vm900, %v611, %v980
        %v1061 = vsel %vm901, %v613, %v981
        %v1062 = vsel %vm902, %v724, %v982
        %v1063 = vsel %vm903, %v726, %v983
        %v1064 = vsel %vm904, %v824, %v984
        %v1065 = vsel %vm905, %v617, %v985
        %v1066 = vsel %vm906, %v619, %v986
        %v1067 = vsel %vm907, %v730, %v987
        %v1068 = vsel %vm908, %v732, %v988
        %v1069 = vsel %vm909, %v829, %v989
        %v1070 = vsel %vm910, %v621, %v990
        %v1071 = vsel %vm911, %v623, %v991
        %v1072 = vsel %vm912, %v734, %v992
        %v1073 = vsel %vm913, %v736, %v993
        %v1074 = vsel %vm914, %v832, %v994
        %s1075 = smul.u32 %s24, 512
        %s1076 = ssub.s32 %s1075, 1
        %v1077 = vlaneseq
        %v1078 = vand.u32 %v1077, 127
        %v1079 = vadd.s32 %v1078, 128
        %v1080 = vadd.s32 %v1078, 256
        %v1081 = vadd.s32 %v1078, 384
        %v1082 = vadd.s32 %v1078, 512
        %v1083 = vstv %s1076
        %v1084 = vadd.s32 %v1083, %v1078
        %v1085 = vadd.s32 %v1083, %v1079
        %v1086 = vadd.s32 %v1083, %v1080
        %v1087 = vadd.s32 %v1083, %v1081
        %v1088 = vadd.s32 %v1083, %v1082
        %vm1089 = vcmp.ge.s32.totalorder %v1084, 0
        %vm1090 = vcmp.ge.s32.totalorder %v1085, 0
        %vm1091 = vcmp.ge.s32.totalorder %v1086, 0
        %vm1092 = vcmp.ge.s32.totalorder %v1087, 0
        %vm1093 = vcmp.ge.s32.totalorder %v1088, 0
        %vm1094 = vcmp.lt.s32.totalorder %v1084, 512
        %vm1095 = vcmp.lt.s32.totalorder %v1085, 512
        %vm1096 = vcmp.lt.s32.totalorder %v1086, 512
        %vm1097 = vcmp.lt.s32.totalorder %v1087, 512
        %vm1098 = vcmp.lt.s32.totalorder %v1088, 512
        %vm1099 = vmand %vm1089, %vm1094
        %vm1100 = vmand %vm1090, %vm1095
        %vm1101 = vmand %vm1091, %vm1096
        %vm1102 = vmand %vm1092, %vm1097
        %vm1103 = vmand %vm1093, %vm1098
        %v1104 = vsel %vm1099, 1, 0
        %v1105 = vsel %vm1100, 1, 0
        %v1106 = vsel %vm1101, 1, 0
        %v1107 = vsel %vm1102, 1, 0
        %v1108 = vsel %vm1103, 1, 0
        %vm1109 = vcmp.eq.s32.totalorder %v1104, 1
        %vm1110 = vcmp.eq.s32.totalorder %v1105, 1
        %vm1111 = vcmp.eq.s32.totalorder %v1106, 1
        %vm1112 = vcmp.eq.s32.totalorder %v1107, 1
        %vm1113 = vcmp.eq.s32.totalorder %v1108, 1
        %v1114 = vsel %vm1109, %v995, 0.0
        %v1115 = vsel %vm1110, %v996, 0.0
        %v1116 = vsel %vm1111, %v997, 0.0
        %v1117 = vsel %vm1112, %v998, 0.0
        %v1118 = vsel %vm1113, %v999, 0.0
        %v1119 = vsel %vm1109, %v1000, 0.0
        %v1120 = vsel %vm1110, %v1001, 0.0
        %v1121 = vsel %vm1111, %v1002, 0.0
        %v1122 = vsel %vm1112, %v1003, 0.0
        %v1123 = vsel %vm1113, %v1004, 0.0
        %v1124 = vsel %vm1109, %v1005, 0.0
        %v1125 = vsel %vm1110, %v1006, 0.0
        %v1126 = vsel %vm1111, %v1007, 0.0
        %v1127 = vsel %vm1112, %v1008, 0.0
        %v1128 = vsel %vm1113, %v1009, 0.0
        %v1129 = vsel %vm1109, %v1010, 0.0
        %v1130 = vsel %vm1110, %v1011, 0.0
        %v1131 = vsel %vm1111, %v1012, 0.0
        %v1132 = vsel %vm1112, %v1013, 0.0
        %v1133 = vsel %vm1113, %v1014, 0.0
        %v1134 = vsel %vm1109, %v1015, 0.0
        %v1135 = vsel %vm1110, %v1016, 0.0
        %v1136 = vsel %vm1111, %v1017, 0.0
        %v1137 = vsel %vm1112, %v1018, 0.0
        %v1138 = vsel %vm1113, %v1019, 0.0
        %v1139 = vsel %vm1109, %v1020, 0.0
        %v1140 = vsel %vm1110, %v1021, 0.0
        %v1141 = vsel %vm1111, %v1022, 0.0
        %v1142 = vsel %vm1112, %v1023, 0.0
        %v1143 = vsel %vm1113, %v1024, 0.0
        %v1144 = vsel %vm1109, %v1025, 0.0
        %v1145 = vsel %vm1110, %v1026, 0.0
        %v1146 = vsel %vm1111, %v1027, 0.0
        %v1147 = vsel %vm1112, %v1028, 0.0
        %v1148 = vsel %vm1113, %v1029, 0.0
        %v1149 = vsel %vm1109, %v1030, 0.0
        %v1150 = vsel %vm1110, %v1031, 0.0
        %v1151 = vsel %vm1111, %v1032, 0.0
        %v1152 = vsel %vm1112, %v1033, 0.0
        %v1153 = vsel %vm1113, %v1034, 0.0
        %v1154 = vsel %vm1109, %v1035, 0.0
        %v1155 = vsel %vm1110, %v1036, 0.0
        %v1156 = vsel %vm1111, %v1037, 0.0
        %v1157 = vsel %vm1112, %v1038, 0.0
        %v1158 = vsel %vm1113, %v1039, 0.0
        %v1159 = vsel %vm1109, %v1040, 0.0
        %v1160 = vsel %vm1110, %v1041, 0.0
        %v1161 = vsel %vm1111, %v1042, 0.0
        %v1162 = vsel %vm1112, %v1043, 0.0
        %v1163 = vsel %vm1113, %v1044, 0.0
        %v1164 = vsel %vm1109, %v1045, 0.0
        %v1165 = vsel %vm1110, %v1046, 0.0
        %v1166 = vsel %vm1111, %v1047, 0.0
        %v1167 = vsel %vm1112, %v1048, 0.0
        %v1168 = vsel %vm1113, %v1049, 0.0
        %v1169 = vsel %vm1109, %v1050, 0.0
        %v1170 = vsel %vm1110, %v1051, 0.0
        %v1171 = vsel %vm1111, %v1052, 0.0
        %v1172 = vsel %vm1112, %v1053, 0.0
        %v1173 = vsel %vm1113, %v1054, 0.0
        %v1174 = vsel %vm1109, %v1055, 0.0
        %v1175 = vsel %vm1110, %v1056, 0.0
        %v1176 = vsel %vm1111, %v1057, 0.0
        %v1177 = vsel %vm1112, %v1058, 0.0
        %v1178 = vsel %vm1113, %v1059, 0.0
        %v1179 = vsel %vm1109, %v1060, 0.0
        %v1180 = vsel %vm1110, %v1061, 0.0
        %v1181 = vsel %vm1111, %v1062, 0.0
        %v1182 = vsel %vm1112, %v1063, 0.0
        %v1183 = vsel %vm1113, %v1064, 0.0
        %v1184 = vsel %vm1109, %v1065, 0.0
        %v1185 = vsel %vm1110, %v1066, 0.0
        %v1186 = vsel %vm1111, %v1067, 0.0
        %v1187 = vsel %vm1112, %v1068, 0.0
        %v1188 = vsel %vm1113, %v1069, 0.0
        %v1189 = vsel %vm1109, %v1070, 0.0
        %v1190 = vsel %vm1110, %v1071, 0.0
        %v1191 = vsel %vm1111, %v1072, 0.0
        %v1192 = vsel %vm1112, %v1073, 0.0
        %v1193 = vsel %vm1113, %v1074, 0.0
        %v1194 = vpack.c.bf16 %v1119, %v1114
        %v1195 = vpack.c.bf16 %v1120, %v1115
        %v1196 = vpack.c.bf16 %v1121, %v1116
        %v1197 = vpack.c.bf16 %v1122, %v1117
        %v1198 = vpack.c.bf16 %v1123, %v1118
        %v1199 = vpack.c.bf16 %v1129, %v1124
        %v1200 = vpack.c.bf16 %v1130, %v1125
        %v1201 = vpack.c.bf16 %v1131, %v1126
        %v1202 = vpack.c.bf16 %v1132, %v1127
        %v1203 = vpack.c.bf16 %v1133, %v1128
        %v1204 = vpack.c.bf16 %v1139, %v1134
        %v1205 = vpack.c.bf16 %v1140, %v1135
        %v1206 = vpack.c.bf16 %v1141, %v1136
        %v1207 = vpack.c.bf16 %v1142, %v1137
        %v1208 = vpack.c.bf16 %v1143, %v1138
        %v1209 = vpack.c.bf16 %v1149, %v1144
        %v1210 = vpack.c.bf16 %v1150, %v1145
        %v1211 = vpack.c.bf16 %v1151, %v1146
        %v1212 = vpack.c.bf16 %v1152, %v1147
        %v1213 = vpack.c.bf16 %v1153, %v1148
        %v1214 = vpack.c.bf16 %v1159, %v1154
        %v1215 = vpack.c.bf16 %v1160, %v1155
        %v1216 = vpack.c.bf16 %v1161, %v1156
        %v1217 = vpack.c.bf16 %v1162, %v1157
        %v1218 = vpack.c.bf16 %v1163, %v1158
        %v1219 = vpack.c.bf16 %v1169, %v1164
        %v1220 = vpack.c.bf16 %v1170, %v1165
        %v1221 = vpack.c.bf16 %v1171, %v1166
        %v1222 = vpack.c.bf16 %v1172, %v1167
        %v1223 = vpack.c.bf16 %v1173, %v1168
        %v1224 = vpack.c.bf16 %v1179, %v1174
        %v1225 = vpack.c.bf16 %v1180, %v1175
        %v1226 = vpack.c.bf16 %v1181, %v1176
        %v1227 = vpack.c.bf16 %v1182, %v1177
        %v1228 = vpack.c.bf16 %v1183, %v1178
        %v1229 = vpack.c.bf16 %v1189, %v1184
        %v1230 = vpack.c.bf16 %v1190, %v1185
        %v1231 = vpack.c.bf16 %v1191, %v1186
        %v1232 = vpack.c.bf16 %v1192, %v1187
        %v1233 = vpack.c.bf16 %v1193, %v1188
        %1274 = vrot.lane.b32.xlu0 %v1194, 127
        %v1275 = vpop.permute.xlu0 %1274
        %1276 = vrot.lane.b32.xlu0 %v1195, 127
        %v1277 = vpop.permute.xlu0 %1276
        %1278 = vrot.lane.b32.xlu0 %v1196, 127
        %v1279 = vpop.permute.xlu0 %1278
        %1280 = vrot.lane.b32.xlu0 %v1197, 127
        %v1281 = vpop.permute.xlu0 %1280
        %1282 = vrot.lane.b32.xlu0 %v1198, 127
        %v1283 = vpop.permute.xlu0 %1282
        %1284 = vrot.lane.b32.xlu0 %v1199, 127
        %v1285 = vpop.permute.xlu0 %1284
        %1286 = vrot.lane.b32.xlu0 %v1200, 127
        %v1287 = vpop.permute.xlu0 %1286
        %1288 = vrot.lane.b32.xlu0 %v1201, 127
        %v1289 = vpop.permute.xlu0 %1288
        %1290 = vrot.lane.b32.xlu0 %v1202, 127
        %v1291 = vpop.permute.xlu0 %1290
        %1292 = vrot.lane.b32.xlu0 %v1203, 127
        %v1293 = vpop.permute.xlu0 %1292
        %1294 = vrot.lane.b32.xlu0 %v1204, 127
        %v1295 = vpop.permute.xlu0 %1294
        %1296 = vrot.lane.b32.xlu0 %v1205, 127
        %v1297 = vpop.permute.xlu0 %1296
        %1298 = vrot.lane.b32.xlu0 %v1206, 127
        %v1299 = vpop.permute.xlu0 %1298
        %1300 = vrot.lane.b32.xlu0 %v1207, 127
        %v1301 = vpop.permute.xlu0 %1300
        %1302 = vrot.lane.b32.xlu0 %v1208, 127
        %v1303 = vpop.permute.xlu0 %1302
        %1304 = vrot.lane.b32.xlu0 %v1209, 127
        %v1305 = vpop.permute.xlu0 %1304
        %1306 = vrot.lane.b32.xlu0 %v1210, 127
        %v1307 = vpop.permute.xlu0 %1306
        %1308 = vrot.lane.b32.xlu0 %v1211, 127
        %v1309 = vpop.permute.xlu0 %1308
        %1310 = vrot.lane.b32.xlu0 %v1212, 127
        %v1311 = vpop.permute.xlu0 %1310
        %1312 = vrot.lane.b32.xlu0 %v1213, 127
        %v1313 = vpop.permute.xlu0 %1312
        %1314 = vrot.lane.b32.xlu0 %v1214, 127
        %v1315 = vpop.permute.xlu0 %1314
        %1316 = vrot.lane.b32.xlu0 %v1215, 127
        %v1317 = vpop.permute.xlu0 %1316
        %1318 = vrot.lane.b32.xlu0 %v1216, 127
        %v1319 = vpop.permute.xlu0 %1318
        %1320 = vrot.lane.b32.xlu0 %v1217, 127
        %v1321 = vpop.permute.xlu0 %1320
        %1322 = vrot.lane.b32.xlu0 %v1218, 127
        %v1323 = vpop.permute.xlu0 %1322
        %1324 = vrot.lane.b32.xlu0 %v1219, 127
        %v1325 = vpop.permute.xlu0 %1324
        %1326 = vrot.lane.b32.xlu0 %v1220, 127
        %v1327 = vpop.permute.xlu0 %1326
        %1328 = vrot.lane.b32.xlu0 %v1221, 127
        %v1329 = vpop.permute.xlu0 %1328
        %1330 = vrot.lane.b32.xlu0 %v1222, 127
        %v1331 = vpop.permute.xlu0 %1330
        %1332 = vrot.lane.b32.xlu0 %v1223, 127
        %v1333 = vpop.permute.xlu0 %1332
        %1334 = vrot.lane.b32.xlu0 %v1224, 127
        %v1335 = vpop.permute.xlu0 %1334
        %1336 = vrot.lane.b32.xlu0 %v1225, 127
        %v1337 = vpop.permute.xlu0 %1336
        %1338 = vrot.lane.b32.xlu0 %v1226, 127
        %v1339 = vpop.permute.xlu0 %1338
        %1340 = vrot.lane.b32.xlu0 %v1227, 127
        %v1341 = vpop.permute.xlu0 %1340
        %1342 = vrot.lane.b32.xlu0 %v1228, 127
        %v1343 = vpop.permute.xlu0 %1342
        %1344 = vrot.lane.b32.xlu0 %v1229, 127
        %v1345 = vpop.permute.xlu0 %1344
        %1346 = vrot.lane.b32.xlu0 %v1230, 127
        %v1347 = vpop.permute.xlu0 %1346
        %1348 = vrot.lane.b32.xlu0 %v1231, 127
        %v1349 = vpop.permute.xlu0 %1348
        %1350 = vrot.lane.b32.xlu0 %v1232, 127
        %v1351 = vpop.permute.xlu0 %1350
        %1352 = vrot.lane.b32.xlu0 %v1233, 127
        %v1353 = vpop.permute.xlu0 %1352
        %v1354 = vsel %vm279, %v1275, %v1277
        %v1355 = vsel %vm279, %v1277, %v1279
        %v1356 = vsel %vm279, %v1279, %v1281
        %v1357 = vsel %vm279, %v1281, %v1283
        %v1358 = vsel %vm279, %v1285, %v1287
        %v1359 = vsel %vm279, %v1287, %v1289
        %v1360 = vsel %vm279, %v1289, %v1291
        %v1361 = vsel %vm279, %v1291, %v1293
        %v1362 = vsel %vm279, %v1295, %v1297
        %v1363 = vsel %vm279, %v1297, %v1299
        %v1364 = vsel %vm279, %v1299, %v1301
        %v1365 = vsel %vm279, %v1301, %v1303
        %v1366 = vsel %vm279, %v1305, %v1307
        %v1367 = vsel %vm279, %v1307, %v1309
        %v1368 = vsel %vm279, %v1309, %v1311
        %v1369 = vsel %vm279, %v1311, %v1313
        %v1370 = vsel %vm279, %v1315, %v1317
        %v1371 = vsel %vm279, %v1317, %v1319
        %v1372 = vsel %vm279, %v1319, %v1321
        %v1373 = vsel %vm279, %v1321, %v1323
        %v1374 = vsel %vm279, %v1325, %v1327
        %v1375 = vsel %vm279, %v1327, %v1329
        %v1376 = vsel %vm279, %v1329, %v1331
        %v1377 = vsel %vm279, %v1331, %v1333
        %v1378 = vsel %vm279, %v1335, %v1337
        %v1379 = vsel %vm279, %v1337, %v1339
        %v1380 = vsel %vm279, %v1339, %v1341
        %v1381 = vsel %vm279, %v1341, %v1343
        %v1382 = vsel %vm279, %v1345, %v1347
        %v1383 = vsel %vm279, %v1347, %v1349
        %v1384 = vsel %vm279, %v1349, %v1351
        %v1385 = vsel %vm279, %v1351, %v1353
        %1418 = vrot.lane.b32.xlu0 %v1194, 126
        %v1419 = vpop.permute.xlu0 %1418
        %1420 = vrot.lane.b32.xlu0 %v1195, 126
        %v1421 = vpop.permute.xlu0 %1420
        %1422 = vrot.lane.b32.xlu0 %v1196, 126
        %v1423 = vpop.permute.xlu0 %1422
        %1424 = vrot.lane.b32.xlu0 %v1197, 126
        %v1425 = vpop.permute.xlu0 %1424
        %1426 = vrot.lane.b32.xlu0 %v1198, 126
        %v1427 = vpop.permute.xlu0 %1426
        %1428 = vrot.lane.b32.xlu0 %v1199, 126
        %v1429 = vpop.permute.xlu0 %1428
        %1430 = vrot.lane.b32.xlu0 %v1200, 126
        %v1431 = vpop.permute.xlu0 %1430
        %1432 = vrot.lane.b32.xlu0 %v1201, 126
        %v1433 = vpop.permute.xlu0 %1432
        %1434 = vrot.lane.b32.xlu0 %v1202, 126
        %v1435 = vpop.permute.xlu0 %1434
        %1436 = vrot.lane.b32.xlu0 %v1203, 126
        %v1437 = vpop.permute.xlu0 %1436
        %1438 = vrot.lane.b32.xlu0 %v1204, 126
        %v1439 = vpop.permute.xlu0 %1438
        %1440 = vrot.lane.b32.xlu0 %v1205, 126
        %v1441 = vpop.permute.xlu0 %1440
        %1442 = vrot.lane.b32.xlu0 %v1206, 126
        %v1443 = vpop.permute.xlu0 %1442
        %1444 = vrot.lane.b32.xlu0 %v1207, 126
        %v1445 = vpop.permute.xlu0 %1444
        %1446 = vrot.lane.b32.xlu0 %v1208, 126
        %v1447 = vpop.permute.xlu0 %1446
        %1448 = vrot.lane.b32.xlu0 %v1209, 126
        %v1449 = vpop.permute.xlu0 %1448
        %1450 = vrot.lane.b32.xlu0 %v1210, 126
        %v1451 = vpop.permute.xlu0 %1450
        %1452 = vrot.lane.b32.xlu0 %v1211, 126
        %v1453 = vpop.permute.xlu0 %1452
        %1454 = vrot.lane.b32.xlu0 %v1212, 126
        %v1455 = vpop.permute.xlu0 %1454
        %1456 = vrot.lane.b32.xlu0 %v1213, 126
        %v1457 = vpop.permute.xlu0 %1456
        %1458 = vrot.lane.b32.xlu0 %v1214, 126
        %v1459 = vpop.permute.xlu0 %1458
        %1460 = vrot.lane.b32.xlu0 %v1215, 126
        %v1461 = vpop.permute.xlu0 %1460
        %1462 = vrot.lane.b32.xlu0 %v1216, 126
        %v1463 = vpop.permute.xlu0 %1462
        %1464 = vrot.lane.b32.xlu0 %v1217, 126
        %v1465 = vpop.permute.xlu0 %1464
        %1466 = vrot.lane.b32.xlu0 %v1218, 126
        %v1467 = vpop.permute.xlu0 %1466
        %1468 = vrot.lane.b32.xlu0 %v1219, 126
        %v1469 = vpop.permute.xlu0 %1468
        %1470 = vrot.lane.b32.xlu0 %v1220, 126
        %v1471 = vpop.permute.xlu0 %1470
        %1472 = vrot.lane.b32.xlu0 %v1221, 126
        %v1473 = vpop.permute.xlu0 %1472
        %1474 = vrot.lane.b32.xlu0 %v1222, 126
        %v1475 = vpop.permute.xlu0 %1474
        %1476 = vrot.lane.b32.xlu0 %v1223, 126
        %v1477 = vpop.permute.xlu0 %1476
        %1478 = vrot.lane.b32.xlu0 %v1224, 126
        %v1479 = vpop.permute.xlu0 %1478
        %1480 = vrot.lane.b32.xlu0 %v1225, 126
        %v1481 = vpop.permute.xlu0 %1480
        %1482 = vrot.lane.b32.xlu0 %v1226, 126
        %v1483 = vpop.permute.xlu0 %1482
        %1484 = vrot.lane.b32.xlu0 %v1227, 126
        %v1485 = vpop.permute.xlu0 %1484
        %1486 = vrot.lane.b32.xlu0 %v1228, 126
        %v1487 = vpop.permute.xlu0 %1486
        %1488 = vrot.lane.b32.xlu0 %v1229, 126
        %v1489 = vpop.permute.xlu0 %1488
        %1490 = vrot.lane.b32.xlu0 %v1230, 126
        %v1491 = vpop.permute.xlu0 %1490
        %1492 = vrot.lane.b32.xlu0 %v1231, 126
        %v1493 = vpop.permute.xlu0 %1492
        %1494 = vrot.lane.b32.xlu0 %v1232, 126
        %v1495 = vpop.permute.xlu0 %1494
        %1496 = vrot.lane.b32.xlu0 %v1233, 126
        %v1497 = vpop.permute.xlu0 %1496
        %v1498 = vsel %vm294, %v1419, %v1421
        %v1499 = vsel %vm294, %v1421, %v1423
        %v1500 = vsel %vm294, %v1423, %v1425
        %v1501 = vsel %vm294, %v1425, %v1427
        %v1502 = vsel %vm294, %v1429, %v1431
        %v1503 = vsel %vm294, %v1431, %v1433
        %v1504 = vsel %vm294, %v1433, %v1435
        %v1505 = vsel %vm294, %v1435, %v1437
        %v1506 = vsel %vm294, %v1439, %v1441
        %v1507 = vsel %vm294, %v1441, %v1443
        %v1508 = vsel %vm294, %v1443, %v1445
        %v1509 = vsel %vm294, %v1445, %v1447
        %v1510 = vsel %vm294, %v1449, %v1451
        %v1511 = vsel %vm294, %v1451, %v1453
        %v1512 = vsel %vm294, %v1453, %v1455
        %v1513 = vsel %vm294, %v1455, %v1457
        %v1514 = vsel %vm294, %v1459, %v1461
        %v1515 = vsel %vm294, %v1461, %v1463
        %v1516 = vsel %vm294, %v1463, %v1465
        %v1517 = vsel %vm294, %v1465, %v1467
        %v1518 = vsel %vm294, %v1469, %v1471
        %v1519 = vsel %vm294, %v1471, %v1473
        %v1520 = vsel %vm294, %v1473, %v1475
        %v1521 = vsel %vm294, %v1475, %v1477
        %v1522 = vsel %vm294, %v1479, %v1481
        %v1523 = vsel %vm294, %v1481, %v1483
        %v1524 = vsel %vm294, %v1483, %v1485
        %v1525 = vsel %vm294, %v1485, %v1487
        %v1526 = vsel %vm294, %v1489, %v1491
        %v1527 = vsel %vm294, %v1491, %v1493
        %v1528 = vsel %vm294, %v1493, %v1495
        %v1529 = vsel %vm294, %v1495, %v1497
        %v1562 = vld [vmem:[%s3] sm:$0xff]
        %v1563 = vld [vmem:[%s3 + $0x8] sm:$0xf]
        %v1564 = vld [vmem:[%s3 + $0xc] sm:$0xff]
        %v1565 = vld [vmem:[%s3 + $0x14] sm:$0xf]
        %v1566 = vld [vmem:[%s3 + $0x18] sm:$0xff]
        %v1567 = vld [vmem:[%s3 + $0x20] sm:$0xf]
        %v1568 = vld [vmem:[%s3 + $0x24] sm:$0xff]
        %v1569 = vld [vmem:[%s3 + $0x2c] sm:$0xf]
        %v1570 = vld [vmem:[%s3 + $0x30] sm:$0xff]
        %v1571 = vld [vmem:[%s3 + $0x38] sm:$0xf]
        %v1572 = vld [vmem:[%s3 + $0x3c] sm:$0xff]
        %v1573 = vld [vmem:[%s3 + $0x44] sm:$0xf]
        %v1574 = vld [vmem:[%s3 + $0x48] sm:$0xff]
        %v1575 = vld [vmem:[%s3 + $0x50] sm:$0xf]
        %v1576 = vld [vmem:[%s3 + $0x54] sm:$0xff]
        %v1577 = vld [vmem:[%s3 + $0x5c] sm:$0xf]
        %v1578 = vld [vmem:[%s3 + $0x60] sm:$0xff]
        %v1579 = vld [vmem:[%s3 + $0x68] sm:$0xf]
        %v1580 = vld [vmem:[%s3 + $0x6c] sm:$0xff]
        %v1581 = vld [vmem:[%s3 + $0x74] sm:$0xf]
        %v1582 = vld [vmem:[%s3 + $0x78] sm:$0xff]
        %v1583 = vld [vmem:[%s3 + $0x80] sm:$0xf]
        %v1584 = vld [vmem:[%s3 + $0x84] sm:$0xff]
        %v1585 = vld [vmem:[%s3 + $0x8c] sm:$0xf]
        %v1586 = vld [vmem:[%s3 + $0x90] sm:$0xff]
        %v1587 = vld [vmem:[%s3 + $0x98] sm:$0xf]
        %v1588 = vld [vmem:[%s3 + $0x9c] sm:$0xff]
        %v1589 = vld [vmem:[%s3 + $0xa4] sm:$0xf]
        %v1590 = vld [vmem:[%s3 + $0xa8] sm:$0xff]
        %v1591 = vld [vmem:[%s3 + $0xb0] sm:$0xf]
        %v1592 = vld [vmem:[%s3 + $0xb4] sm:$0xff]
        %v1593 = vld [vmem:[%s3 + $0xbc] sm:$0xf]
        %v1594 = vld [vmem:[%s4] sm:$0xff]
        %v1595 = vld [vmem:[%s4 + $0x8] sm:$0xff]
        %v1596 = vld [vmem:[%s4 + $0x10] sm:$0xff]
        %v1597 = vld [vmem:[%s4 + $0x18] sm:$0xff]
        %v1598 = vld [vmem:[%s4 + $0x20] sm:$0xff]
        %v1599 = vld [vmem:[%s4 + $0x28] sm:$0xff]
        %v1600 = vld [vmem:[%s4 + $0x30] sm:$0xff]
        %v1601 = vld [vmem:[%s4 + $0x38] sm:$0xff]
        %v1602 = vld [vmem:[%s4 + $0x40] sm:$0xff]
        %v1603 = vld [vmem:[%s4 + $0x48] sm:$0xff]
        %v1604 = vld [vmem:[%s4 + $0x50] sm:$0xff]
        %v1605 = vld [vmem:[%s4 + $0x58] sm:$0xff]
        %v1606 = vld [vmem:[%s4 + $0x60] sm:$0xff]
        %v1607 = vld [vmem:[%s4 + $0x68] sm:$0xff]
        %v1608 = vld [vmem:[%s4 + $0x70] sm:$0xff]
        %v1609 = vld [vmem:[%s4 + $0x78] sm:$0xff]
        %1611 = vset.pattern.permute.xlu0 0
        %1612 = vperm.xlu0 %1611, %v1594
        %v1613 = vpop.permute.xlu0 %1612
        %1616 = vset.pattern.permute.xlu0 0
        %1617 = vperm.xlu0 %1616, %v1595
        %v1618 = vpop.permute.xlu0 %1617
        %1621 = vset.pattern.permute.xlu0 0
        %1622 = vperm.xlu0 %1621, %v1596
        %v1623 = vpop.permute.xlu0 %1622
        %1625 = vset.pattern.permute.xlu0 0
        %1626 = vperm.xlu0 %1625, %v1597
        %v1627 = vpop.permute.xlu0 %1626
        %1629 = vset.pattern.permute.xlu0 0
        %1630 = vperm.xlu0 %1629, %v1598
        %v1631 = vpop.permute.xlu0 %1630
        %1633 = vset.pattern.permute.xlu0 0
        %1634 = vperm.xlu0 %1633, %v1599
        %v1635 = vpop.permute.xlu0 %1634
        %1637 = vset.pattern.permute.xlu0 0
        %1638 = vperm.xlu0 %1637, %v1600
        %v1639 = vpop.permute.xlu0 %1638
        %1641 = vset.pattern.permute.xlu0 0
        %1642 = vperm.xlu0 %1641, %v1601
        %v1643 = vpop.permute.xlu0 %1642
        %1645 = vset.pattern.permute.xlu0 0
        %1646 = vperm.xlu0 %1645, %v1602
        %v1647 = vpop.permute.xlu0 %1646
        %1649 = vset.pattern.permute.xlu0 0
        %1650 = vperm.xlu0 %1649, %v1603
        %v1651 = vpop.permute.xlu0 %1650
        %1653 = vset.pattern.permute.xlu0 0
        %1654 = vperm.xlu0 %1653, %v1604
        %v1655 = vpop.permute.xlu0 %1654
        %1657 = vset.pattern.permute.xlu0 0
        %1658 = vperm.xlu0 %1657, %v1605
        %v1659 = vpop.permute.xlu0 %1658
        %1661 = vset.pattern.permute.xlu0 0
        %1662 = vperm.xlu0 %1661, %v1606
        %v1663 = vpop.permute.xlu0 %1662
        %1665 = vset.pattern.permute.xlu0 0
        %1666 = vperm.xlu0 %1665, %v1607
        %v1667 = vpop.permute.xlu0 %1666
        %1669 = vset.pattern.permute.xlu0 0
        %1670 = vperm.xlu0 %1669, %v1608
        %v1671 = vpop.permute.xlu0 %1670
        %1673 = vset.pattern.permute.xlu0 0
        %1674 = vperm.xlu0 %1673, %v1609
        %v1675 = vpop.permute.xlu0 %1674
        %v1708 = vunpack.c.l.b16 %v1562
        %v1709 = vunpack.c.h.b16 %v1562
        %v1710 = vunpack.c.l.b16 %v1563
        %v1711 = vunpack.c.l.b16 %v1564
        %v1712 = vunpack.c.h.b16 %v1564
        %v1713 = vunpack.c.l.b16 %v1565
        %v1714 = vunpack.c.l.b16 %v1566
        %v1715 = vunpack.c.h.b16 %v1566
        %v1716 = vunpack.c.l.b16 %v1567
        %v1717 = vunpack.c.l.b16 %v1568
        %v1718 = vunpack.c.h.b16 %v1568
        %v1719 = vunpack.c.l.b16 %v1569
        %v1720 = vunpack.c.l.b16 %v1570
        %v1721 = vunpack.c.h.b16 %v1570
        %v1722 = vunpack.c.l.b16 %v1571
        %v1723 = vunpack.c.l.b16 %v1572
        %v1724 = vunpack.c.h.b16 %v1572
        %v1725 = vunpack.c.l.b16 %v1573
        %v1726 = vunpack.c.l.b16 %v1574
        %v1727 = vunpack.c.h.b16 %v1574
        %v1728 = vunpack.c.l.b16 %v1575
        %v1729 = vunpack.c.l.b16 %v1576
        %v1730 = vunpack.c.h.b16 %v1576
        %v1731 = vunpack.c.l.b16 %v1577
        %v1732 = vunpack.c.l.b16 %v1578
        %v1733 = vunpack.c.h.b16 %v1578
        %v1734 = vunpack.c.l.b16 %v1579
        %v1735 = vunpack.c.l.b16 %v1580
        %v1736 = vunpack.c.h.b16 %v1580
        %v1737 = vunpack.c.l.b16 %v1581
        %v1738 = vunpack.c.l.b16 %v1582
        %v1739 = vunpack.c.h.b16 %v1582
        %v1740 = vunpack.c.l.b16 %v1583
        %v1741 = vunpack.c.l.b16 %v1584
        %v1742 = vunpack.c.h.b16 %v1584
        %v1743 = vunpack.c.l.b16 %v1585
        %v1744 = vunpack.c.l.b16 %v1586
        %v1745 = vunpack.c.h.b16 %v1586
        %v1746 = vunpack.c.l.b16 %v1587
        %v1747 = vunpack.c.l.b16 %v1588
        %v1748 = vunpack.c.h.b16 %v1588
        %v1749 = vunpack.c.l.b16 %v1589
        %v1750 = vunpack.c.l.b16 %v1590
        %v1751 = vunpack.c.h.b16 %v1590
        %v1752 = vunpack.c.l.b16 %v1591
        %v1753 = vunpack.c.l.b16 %v1592
        %v1754 = vunpack.c.h.b16 %v1592
        %v1755 = vunpack.c.l.b16 %v1593
        %v1756 = vpack.c.b16 %v1711, %v1708
        %v1757 = vpack.c.b16 %v1712, %v1709
        %v1758 = vpack.c.b16 %v1713, %v1710
        %v1759 = vpack.c.b16 %v1717, %v1714
        %v1760 = vpack.c.b16 %v1718, %v1715
        %v1761 = vpack.c.b16 %v1719, %v1716
        %v1762 = vpack.c.b16 %v1723, %v1720
        %v1763 = vpack.c.b16 %v1724, %v1721
        %v1764 = vpack.c.b16 %v1725, %v1722
        %v1765 = vpack.c.b16 %v1729, %v1726
        %v1766 = vpack.c.b16 %v1730, %v1727
        %v1767 = vpack.c.b16 %v1731, %v1728
        %v1768 = vpack.c.b16 %v1735, %v1732
        %v1769 = vpack.c.b16 %v1736, %v1733
        %v1770 = vpack.c.b16 %v1737, %v1734
        %v1771 = vpack.c.b16 %v1741, %v1738
        %v1772 = vpack.c.b16 %v1742, %v1739
        %v1773 = vpack.c.b16 %v1743, %v1740
        %v1774 = vpack.c.b16 %v1747, %v1744
        %v1775 = vpack.c.b16 %v1748, %v1745
        %v1776 = vpack.c.b16 %v1749, %v1746
        %v1777 = vpack.c.b16 %v1753, %v1750
        %v1778 = vpack.c.b16 %v1754, %v1751
        %v1779 = vpack.c.b16 %v1755, %v1752
        %1804 = vmatprep.subr.bf16.mxu0 %v1195
        %1805 = vmatpush1.bf16.msra.mxu0 %v1194
        %1806 = vmatprep.subr.bf16.mxu0 %v1200
        %1807 = vmatpush1.bf16.msra.mxu0 %v1199
        %1808 = vmatprep.subr.bf16.mxu0 %v1205
        %1809 = vmatpush1.bf16.msra.mxu0 %v1204
        %1810 = vmatprep.subr.bf16.mxu0 %v1210
        %1811 = vmatpush1.bf16.msra.mxu0 %v1209
        %1812 = vmatprep.subr.bf16.mxu0 %v1215
        %1813 = vmatpush1.bf16.msra.mxu0 %v1214
        %1814 = vmatprep.subr.bf16.mxu0 %v1220
        %1815 = vmatpush1.bf16.msra.mxu0 %v1219
        %1816 = vmatprep.subr.bf16.mxu0 %v1225
        %1817 = vmatpush1.bf16.msra.mxu0 %v1224
        %1818 = vmatprep.subr.bf16.mxu0 %v1230
        %1819 = vmatpush1.bf16.msra.mxu0 %v1229
        %1820 = vmatprep.subr.bf16.mxu0 %v1355
        %1821 = vmatpush1.bf16.msra.mxu0 %v1354
        %1822 = vmatprep.subr.bf16.mxu0 %v1359
        %1823 = vmatpush1.bf16.msra.mxu0 %v1358
        %1824 = vmatprep.subr.bf16.mxu0 %v1363
        %1825 = vmatpush1.bf16.msra.mxu0 %v1362
        %1826 = vmatprep.subr.bf16.mxu0 %v1367
        %1827 = vmatpush1.bf16.msra.mxu0 %v1366
        %1828 = vmatprep.subr.bf16.mxu0 %v1371
        %1829 = vmatpush1.bf16.msra.mxu0 %v1370
        %1830 = vmatprep.subr.bf16.mxu0 %v1375
        %1831 = vmatpush1.bf16.msra.mxu0 %v1374
        %1832 = vmatprep.subr.bf16.mxu0 %v1379
        %1833 = vmatpush1.bf16.msra.mxu0 %v1378
        %1834 = vmatprep.subr.bf16.mxu0 %v1383
        %1835 = vmatpush1.bf16.msra.mxu0 %v1382
        %1836 = vmatprep.mubr.bf16.mxu0 %v1757
        %1837 = vmatmul.mubr.bf16.gmra.mrb[0].mxu0 %v1756
        %v1838 = vpop.f32.mrb[0].mxu0
        %v1839 = vadd.f32 %v1613, %v1838
        %v1840 = vpop.f32.mrb[0].mxu0
        %v1841 = vadd.f32 %v1613, %v1840
        %v1842 = vpop.f32.mrb[0].mxu0
        %v1843 = vadd.f32 %v1618, %v1842
        %v1844 = vpop.f32.mrb[0].mxu0
        %v1845 = vadd.f32 %v1618, %v1844
        %1846 = vmatprep.mubr.bf16.mxu0 %v1760
        %1847 = vmatmul.mubr.bf16.gmra.mrb[0].mxu0 %v1759
        %v1848 = vpop.f32.mrb[0].mxu0
        %v1849 = vpop.f32.mrb[0].mxu0
        %v1850 = vpop.f32.mrb[0].mxu0
        %v1851 = vpop.f32.mrb[0].mxu0
        %1852 = vmatprep.mubr.bf16.mxu0 %v1763
        %1853 = vmatmul.mubr.bf16.gmra.mrb[0].mxu0 %v1762
        %v1854 = vpop.f32.mrb[0].mxu0
        %v1855 = vpop.f32.mrb[0].mxu0
        %v1856 = vpop.f32.mrb[0].mxu0
        %v1857 = vpop.f32.mrb[0].mxu0
        %1858 = vmatprep.mubr.bf16.mxu0 %v1766
        %1859 = vmatmul.mubr.bf16.gmra.mrb[0].mxu0 %v1765
        %v1860 = vpop.f32.mrb[0].mxu0
        %v1861 = vpop.f32.mrb[0].mxu0
        %v1862 = vpop.f32.mrb[0].mxu0
        %v1863 = vpop.f32.mrb[0].mxu0
        %1864 = vmatprep.mubr.bf16.mxu0 %v1769
        %1865 = vmatmul.mubr.bf16.gmra.mrb[0].mxu0 %v1768
        %v1866 = vpop.f32.mrb[0].mxu0
        %v1867 = vpop.f32.mrb[0].mxu0
        %v1868 = vpop.f32.mrb[0].mxu0
        %v1869 = vpop.f32.mrb[0].mxu0
        %1870 = vmatprep.mubr.bf16.mxu0 %v1772
        %1871 = vmatmul.mubr.bf16.gmra.mrb[0].mxu0 %v1771
        %v1872 = vpop.f32.mrb[0].mxu0
        %v1873 = vpop.f32.mrb[0].mxu0
        %v1874 = vpop.f32.mrb[0].mxu0
        %v1875 = vpop.f32.mrb[0].mxu0
        %1876 = vmatprep.mubr.bf16.mxu0 %v1775
        %1877 = vmatmul.mubr.bf16.gmra.mrb[0].mxu0 %v1774
        %v1878 = vpop.f32.mrb[0].mxu0
        %v1879 = vpop.f32.mrb[0].mxu0
        %v1880 = vpop.f32.mrb[0].mxu0
        %v1881 = vpop.f32.mrb[0].mxu0
        %1882 = vmatprep.mubr.bf16.mxu0 %v1778
        %1883 = vmatmul.mubr.bf16.gmra.mrb[0].mxu0 %v1777
        %v1884 = vpop.f32.mrb[0].mxu0
        %v1885 = vpop.f32.mrb[0].mxu0
        %v1886 = vpop.f32.mrb[0].mxu0
        %v1887 = vpop.f32.mrb[0].mxu0
        %1888 = vdwg.mxu0
        %1889 = vmatprep.subr.bf16.mxu0 %v1499
        %1890 = vmatpush1.bf16.msra.mxu0 %v1498
        %1891 = vmatprep.subr.bf16.mxu0 %v1503
        %1892 = vmatpush1.bf16.msra.mxu0 %v1502
        %1893 = vmatprep.subr.bf16.mxu0 %v1507
        %1894 = vmatpush1.bf16.msra.mxu0 %v1506
        %1895 = vmatprep.subr.bf16.mxu0 %v1511
        %1896 = vmatpush1.bf16.msra.mxu0 %v1510
        %1897 = vmatprep.subr.bf16.mxu0 %v1515
        %1898 = vmatpush1.bf16.msra.mxu0 %v1514
        %1899 = vmatprep.subr.bf16.mxu0 %v1519
        %1900 = vmatpush1.bf16.msra.mxu0 %v1518
        %1901 = vmatprep.subr.bf16.mxu0 %v1523
        %1902 = vmatpush1.bf16.msra.mxu0 %v1522
        %1903 = vmatprep.subr.bf16.mxu0 %v1527
        %1904 = vmatpush1.bf16.msra.mxu0 %v1526
        %1905 = vmatprep.subr.bf16.mxu0 0
        %1906 = vmatpush1.bf16.msra.mxu0 0
        %1907 = vmatprep.subr.bf16.mxu0 0
        %1908 = vmatpush1.bf16.msra.mxu0 0
        %1909 = vmatprep.subr.bf16.mxu0 0
        %1910 = vmatpush1.bf16.msra.mxu0 0
        %1911 = vmatprep.subr.bf16.mxu0 0
        %1912 = vmatpush1.bf16.msra.mxu0 0
        %1913 = vmatprep.subr.bf16.mxu0 0
        %1914 = vmatpush1.bf16.msra.mxu0 0
        %1915 = vmatprep.subr.bf16.mxu0 0
        %1916 = vmatpush1.bf16.msra.mxu0 0
        %1917 = vmatprep.subr.bf16.mxu0 0
        %1918 = vmatpush1.bf16.msra.mxu0 0
        %1919 = vmatprep.subr.bf16.mxu0 0
        %1920 = vmatpush1.bf16.msra.mxu0 0
        %1921 = vmatprep.mubr.bf16.mxu0 0
        %1922 = vmatmul.mubr.bf16.gmra.mrb[0].mxu0 %v1758
        %v1923 = vpop.f32.mrb[0].mxu0
        %v1924 = vadd.f32 %v1839, %v1923
        %v1925 = vpop.f32.mrb[0].mxu0
        %v1926 = vadd.f32 %v1841, %v1925
        %v1927 = vpop.f32.mrb[0].mxu0
        %v1928 = vadd.f32 %v1843, %v1927
        %v1929 = vpop.f32.mrb[0].mxu0
        %v1930 = vadd.f32 %v1845, %v1929
        %1931 = vmatprep.mubr.bf16.mxu0 0
        %1932 = vmatmul.mubr.bf16.gmra.mrb[0].mxu0 %v1761
        %v1933 = vpop.f32.mrb[0].mxu0
        %v1934 = vpop.f32.mrb[0].mxu0
        %v1935 = vpop.f32.mrb[0].mxu0
        %v1936 = vpop.f32.mrb[0].mxu0
        %1937 = vmatprep.mubr.bf16.mxu0 0
        %1938 = vmatmul.mubr.bf16.gmra.mrb[0].mxu0 %v1764
        %v1939 = vpop.f32.mrb[0].mxu0
        %v1940 = vpop.f32.mrb[0].mxu0
        %v1941 = vpop.f32.mrb[0].mxu0
        %v1942 = vpop.f32.mrb[0].mxu0
        %1943 = vmatprep.mubr.bf16.mxu0 0
        %1944 = vmatmul.mubr.bf16.gmra.mrb[0].mxu0 %v1767
        %v1945 = vpop.f32.mrb[0].mxu0
        %v1946 = vpop.f32.mrb[0].mxu0
        %v1947 = vpop.f32.mrb[0].mxu0
        %v1948 = vpop.f32.mrb[0].mxu0
        %1949 = vmatprep.mubr.bf16.mxu0 0
        %1950 = vmatmul.mubr.bf16.gmra.mrb[0].mxu0 %v1770
        %v1951 = vpop.f32.mrb[0].mxu0
        %v1952 = vpop.f32.mrb[0].mxu0
        %v1953 = vpop.f32.mrb[0].mxu0
        %v1954 = vpop.f32.mrb[0].mxu0
        %1955 = vmatprep.mubr.bf16.mxu0 0
        %1956 = vmatmul.mubr.bf16.gmra.mrb[0].mxu0 %v1773
        %v1957 = vpop.f32.mrb[0].mxu0
        %v1958 = vpop.f32.mrb[0].mxu0
        %v1959 = vpop.f32.mrb[0].mxu0
        %v1960 = vpop.f32.mrb[0].mxu0
        %1961 = vmatprep.mubr.bf16.mxu0 0
        %1962 = vmatmul.mubr.bf16.gmra.mrb[0].mxu0 %v1776
        %v1963 = vpop.f32.mrb[0].mxu0
        %v1964 = vpop.f32.mrb[0].mxu0
        %v1965 = vpop.f32.mrb[0].mxu0
        %v1966 = vpop.f32.mrb[0].mxu0
        %1967 = vmatprep.mubr.bf16.mxu0 0
        %1968 = vmatmul.mubr.bf16.gmra.mrb[0].mxu0 %v1779
        %v1969 = vpop.f32.mrb[0].mxu0
        %v1970 = vpop.f32.mrb[0].mxu0
        %v1971 = vpop.f32.mrb[0].mxu0
        %v1972 = vpop.f32.mrb[0].mxu0
        %1973 = vdwg.mxu0
        %1974 = vmatprep.subr.bf16.mxu0 %v1197
        %1975 = vmatpush1.bf16.msra.mxu0 %v1196
        %1976 = vmatprep.subr.bf16.mxu0 %v1202
        %1977 = vmatpush1.bf16.msra.mxu0 %v1201
        %1978 = vmatprep.subr.bf16.mxu0 %v1207
        %1979 = vmatpush1.bf16.msra.mxu0 %v1206
        %1980 = vmatprep.subr.bf16.mxu0 %v1212
        %1981 = vmatpush1.bf16.msra.mxu0 %v1211
        %1982 = vmatprep.subr.bf16.mxu0 %v1217
        %1983 = vmatpush1.bf16.msra.mxu0 %v1216
        %1984 = vmatprep.subr.bf16.mxu0 %v1222
        %1985 = vmatpush1.bf16.msra.mxu0 %v1221
        %1986 = vmatprep.subr.bf16.mxu0 %v1227
        %1987 = vmatpush1.bf16.msra.mxu0 %v1226
        %1988 = vmatprep.subr.bf16.mxu0 %v1232
        %1989 = vmatpush1.bf16.msra.mxu0 %v1231
        %1990 = vmatprep.subr.bf16.mxu0 %v1357
        %1991 = vmatpush1.bf16.msra.mxu0 %v1356
        %1992 = vmatprep.subr.bf16.mxu0 %v1361
        %1993 = vmatpush1.bf16.msra.mxu0 %v1360
        %1994 = vmatprep.subr.bf16.mxu0 %v1365
        %1995 = vmatpush1.bf16.msra.mxu0 %v1364
        %1996 = vmatprep.subr.bf16.mxu0 %v1369
        %1997 = vmatpush1.bf16.msra.mxu0 %v1368
        %1998 = vmatprep.subr.bf16.mxu0 %v1373
        %1999 = vmatpush1.bf16.msra.mxu0 %v1372
        %2000 = vmatprep.subr.bf16.mxu0 %v1377
        %2001 = vmatpush1.bf16.msra.mxu0 %v1376
        %2002 = vmatprep.subr.bf16.mxu0 %v1381
        %2003 = vmatpush1.bf16.msra.mxu0 %v1380
        %2004 = vmatprep.subr.bf16.mxu0 %v1385
        %2005 = vmatpush1.bf16.msra.mxu0 %v1384
        %2006 = vmatprep.mubr.bf16.mxu0 %v1757
        %2007 = vmatmul.mubr.bf16.gmra.mrb[0].mxu0 %v1756
        %v2008 = vpop.f32.mrb[0].mxu0
        %v2009 = vadd.f32 %v1613, %v2008
        %v2010 = vpop.f32.mrb[0].mxu0
        %v2011 = vadd.f32 %v1613, %v2010
        %v2012 = vpop.f32.mrb[0].mxu0
        %v2013 = vadd.f32 %v1618, %v2012
        %v2014 = vpop.f32.mrb[0].mxu0
        %v2015 = vadd.f32 %v1618, %v2014
        %2016 = vmatprep.mubr.bf16.mxu0 %v1760
        %2017 = vmatmul.mubr.bf16.gmra.mrb[0].mxu0 %v1759
        %v2018 = vpop.f32.mrb[0].mxu0
        %v2019 = vpop.f32.mrb[0].mxu0
        %v2020 = vpop.f32.mrb[0].mxu0
        %v2021 = vpop.f32.mrb[0].mxu0
        %2022 = vmatprep.mubr.bf16.mxu0 %v1763
        %2023 = vmatmul.mubr.bf16.gmra.mrb[0].mxu0 %v1762
        %v2024 = vpop.f32.mrb[0].mxu0
        %v2025 = vpop.f32.mrb[0].mxu0
        %v2026 = vpop.f32.mrb[0].mxu0
        %v2027 = vpop.f32.mrb[0].mxu0
        %2028 = vmatprep.mubr.bf16.mxu0 %v1766
        %2029 = vmatmul.mubr.bf16.gmra.mrb[0].mxu0 %v1765
        %v2030 = vpop.f32.mrb[0].mxu0
        %v2031 = vpop.f32.mrb[0].mxu0
        %v2032 = vpop.f32.mrb[0].mxu0
        %v2033 = vpop.f32.mrb[0].mxu0
        %2034 = vmatprep.mubr.bf16.mxu0 %v1769
        %2035 = vmatmul.mubr.bf16.gmra.mrb[0].mxu0 %v1768
        %v2036 = vpop.f32.mrb[0].mxu0
        %v2037 = vpop.f32.mrb[0].mxu0
        %v2038 = vpop.f32.mrb[0].mxu0
        %v2039 = vpop.f32.mrb[0].mxu0
        %2040 = vmatprep.mubr.bf16.mxu0 %v1772
        %2041 = vmatmul.mubr.bf16.gmra.mrb[0].mxu0 %v1771
        %v2042 = vpop.f32.mrb[0].mxu0
        %v2043 = vpop.f32.mrb[0].mxu0
        %v2044 = vpop.f32.mrb[0].mxu0
        %v2045 = vpop.f32.mrb[0].mxu0
        %2046 = vmatprep.mubr.bf16.mxu0 %v1775
        %2047 = vmatmul.mubr.bf16.gmra.mrb[0].mxu0 %v1774
        %v2048 = vpop.f32.mrb[0].mxu0
        %v2049 = vpop.f32.mrb[0].mxu0
        %v2050 = vpop.f32.mrb[0].mxu0
        %v2051 = vpop.f32.mrb[0].mxu0
        %2052 = vmatprep.mubr.bf16.mxu0 %v1778
        %2053 = vmatmul.mubr.bf16.gmra.mrb[0].mxu0 %v1777
        %v2054 = vpop.f32.mrb[0].mxu0
        %v2055 = vpop.f32.mrb[0].mxu0
        %v2056 = vpop.f32.mrb[0].mxu0
        %v2057 = vpop.f32.mrb[0].mxu0
        %2058 = vdwg.mxu0
        %2059 = vmatprep.subr.bf16.mxu0 %v1501
        %2060 = vmatpush1.bf16.msra.mxu0 %v1500
        %2061 = vmatprep.subr.bf16.mxu0 %v1505
        %2062 = vmatpush1.bf16.msra.mxu0 %v1504
        %2063 = vmatprep.subr.bf16.mxu0 %v1509
        %2064 = vmatpush1.bf16.msra.mxu0 %v1508
        %2065 = vmatprep.subr.bf16.mxu0 %v1513
        %2066 = vmatpush1.bf16.msra.mxu0 %v1512
        %2067 = vmatprep.subr.bf16.mxu0 %v1517
        %2068 = vmatpush1.bf16.msra.mxu0 %v1516
        %2069 = vmatprep.subr.bf16.mxu0 %v1521
        %2070 = vmatpush1.bf16.msra.mxu0 %v1520
        %2071 = vmatprep.subr.bf16.mxu0 %v1525
        %2072 = vmatpush1.bf16.msra.mxu0 %v1524
        %2073 = vmatprep.subr.bf16.mxu0 %v1529
        %2074 = vmatpush1.bf16.msra.mxu0 %v1528
        %2075 = vmatprep.subr.bf16.mxu0 0
        %2076 = vmatpush1.bf16.msra.mxu0 0
        %2077 = vmatprep.subr.bf16.mxu0 0
        %2078 = vmatpush1.bf16.msra.mxu0 0
        %2079 = vmatprep.subr.bf16.mxu0 0
        %2080 = vmatpush1.bf16.msra.mxu0 0
        %2081 = vmatprep.subr.bf16.mxu0 0
        %2082 = vmatpush1.bf16.msra.mxu0 0
        %2083 = vmatprep.subr.bf16.mxu0 0
        %2084 = vmatpush1.bf16.msra.mxu0 0
        %2085 = vmatprep.subr.bf16.mxu0 0
        %2086 = vmatpush1.bf16.msra.mxu0 0
        %2087 = vmatprep.subr.bf16.mxu0 0
        %2088 = vmatpush1.bf16.msra.mxu0 0
        %2089 = vmatprep.subr.bf16.mxu0 0
        %2090 = vmatpush1.bf16.msra.mxu0 0
        %2091 = vmatprep.mubr.bf16.mxu0 0
        %2092 = vmatmul.mubr.bf16.gmra.mrb[0].mxu0 %v1758
        %v2093 = vpop.f32.mrb[0].mxu0
        %v2094 = vadd.f32 %v2009, %v2093
        %v2095 = vpop.f32.mrb[0].mxu0
        %v2096 = vadd.f32 %v2011, %v2095
        %v2097 = vpop.f32.mrb[0].mxu0
        %v2098 = vadd.f32 %v2013, %v2097
        %v2099 = vpop.f32.mrb[0].mxu0
        %v2100 = vadd.f32 %v2015, %v2099
        %2101 = vmatprep.mubr.bf16.mxu0 0
        %2102 = vmatmul.mubr.bf16.gmra.mrb[0].mxu0 %v1761
        %v2103 = vpop.f32.mrb[0].mxu0
        %v2104 = vpop.f32.mrb[0].mxu0
        %v2105 = vpop.f32.mrb[0].mxu0
        %v2106 = vpop.f32.mrb[0].mxu0
        %2107 = vmatprep.mubr.bf16.mxu0 0
        %2108 = vmatmul.mubr.bf16.gmra.mrb[0].mxu0 %v1764
        %v2109 = vpop.f32.mrb[0].mxu0
        %v2110 = vpop.f32.mrb[0].mxu0
        %v2111 = vpop.f32.mrb[0].mxu0
        %v2112 = vpop.f32.mrb[0].mxu0
        %2113 = vmatprep.mubr.bf16.mxu0 0
        %2114 = vmatmul.mubr.bf16.gmra.mrb[0].mxu0 %v1767
        %v2115 = vpop.f32.mrb[0].mxu0
        %v2116 = vpop.f32.mrb[0].mxu0
        %v2117 = vpop.f32.mrb[0].mxu0
        %v2118 = vpop.f32.mrb[0].mxu0
        %2119 = vmatprep.mubr.bf16.mxu0 0
        %2120 = vmatmul.mubr.bf16.gmra.mrb[0].mxu0 %v1770
        %v2121 = vpop.f32.mrb[0].mxu0
        %v2122 = vpop.f32.mrb[0].mxu0
        %v2123 = vpop.f32.mrb[0].mxu0
        %v2124 = vpop.f32.mrb[0].mxu0
        %2125 = vmatprep.mubr.bf16.mxu0 0
        %2126 = vmatmul.mubr.bf16.gmra.mrb[0].mxu0 %v1773
        %v2127 = vpop.f32.mrb[0].mxu0
        %v2128 = vpop.f32.mrb[0].mxu0
        %v2129 = vpop.f32.mrb[0].mxu0
        %v2130 = vpop.f32.mrb[0].mxu0
        %2131 = vmatprep.mubr.bf16.mxu0 0
        %2132 = vmatmul.mubr.bf16.gmra.mrb[0].mxu0 %v1776
        %v2133 = vpop.f32.mrb[0].mxu0
        %v2134 = vpop.f32.mrb[0].mxu0
        %v2135 = vpop.f32.mrb[0].mxu0
        %v2136 = vpop.f32.mrb[0].mxu0
        %2137 = vmatprep.mubr.bf16.mxu0 0
        %2138 = vmatmul.mubr.bf16.gmra.mrb[0].mxu0 %v1779
        %v2139 = vpop.f32.mrb[0].mxu0
        %v2140 = vpop.f32.mrb[0].mxu0
        %v2141 = vpop.f32.mrb[0].mxu0
        %v2142 = vpop.f32.mrb[0].mxu0
        %2143 = vdwg.mxu0
        %2144 = vst [vmem:[%s241] sm:$0xff] %v1924
        %2145 = vst [vmem:[%s241 + $0x8] sm:$0xff] %v1926
        %2146 = vst [vmem:[%s241 + $0x10] sm:$0xff] %v2094
        %2147 = vst [vmem:[%s241 + $0x18] sm:$0xff] %v2096
        %2148 = vst [vmem:[%s241 + $0x20] sm:$0xff] %v1928
        %2149 = vst [vmem:[%s241 + $0x28] sm:$0xff] %v1930
        %2150 = vst [vmem:[%s241 + $0x30] sm:$0xff] %v2098
        %2151 = vst [vmem:[%s241 + $0x38] sm:$0xff] %v2100
        %s2152 = sand.u32 %s153, 1
        %s2153 = scalar_lea.sflag [#allocation3], %s2152
        %s2154 = sand.u32 %s153, 1
        %s2155 = smul.addr %s2154, 64
        %s2156 = scalar_lea.vmem [#allocation2], %s2155
        // Predicated region
        $region41: #{variational_encoder_forward.1} parent=39 // pred_check
          %p2157 = pneg %p163
        $region42: #{variational_encoder_forward.1} parent=39 // pred_check_branch
          %2159 = sbr.rel (%p2157) target = $region44
        $region43: #{variational_encoder_forward.1} parent=39 // pred_region
          %s2160 = smul.u32 4, %s24
          %s2162 = ssub.s32 1024, 1024
          %2163 = vsyncadd %s2153, %s2162
          %s2164 = smul.addr %s23, 8
          %s2165 = sadd.s32 %s2160, %s2164
          %s2166 = smul.addr %s2165, 128
          %s2167 = scalar_lea.hbm %s5, %s2166
          %s2168 = sshll.u32 %s2156, 4
          %s2169 = int_to_ptr.vmem [resolvable:$true] %s2168
          %2174 = dma.vmem_to_hbm [thread:$0]  %s2169, 1024, %s2167, %s2153, 512, 512, 32
        $region44: #{variational_encoder_forward.1} parent=39 // pred_fallthru
          _
      $region40: #{variational_encoder_forward.1} parent=5 // pred_fallthru
        _
      %p2175 = scmp.le.s32.totalorder 2, %s14
      // Predicated region
      $region45: #{variational_encoder_forward.1} parent=5 // pred_check
        %p2176 = pneg %p2175
      $region46: #{variational_encoder_forward.1} parent=5 // pred_check_branch
        %2178 = sbr.rel (%p2176) target = $region48
      $region47: #{variational_encoder_forward.1} parent=5 // pred_region
        %s2179 = ssub.s32 %s14, 2
        // Predicated region
        $region49: #{variational_encoder_forward.1} parent=47 // pred_check
          %p2180 = pneg %p169
        $region50: #{variational_encoder_forward.1} parent=47 // pred_check_branch
          %2182 = sbr.rel (%p2180) target = $region52
        $region51: #{variational_encoder_forward.1} parent=47 // pred_region
          %s2183 = sand.u32 %s154, 1
          %s2184 = scalar_lea.sflag [#allocation3], %s2183
          %s2185 = sand.u32 %s154, 1
          %s2186 = smul.addr %s2185, 64
          %s2187 = scalar_lea.vmem [#allocation2], %s2186
          %2188 = dma.done %s2184, 1024
        $region52: #{variational_encoder_forward.1} parent=47 // pred_fallthru
          _
      $region48: #{variational_encoder_forward.1} parent=5 // pred_fallthru
        _
    $region6: #{variational_encoder_forward.1} parent=1 // loop_footer
      %s18 = sadd.s32 1, %s14
    $region7: #{variational_encoder_forward.1} parent=1 // loop_footer_branch
      %13 = sbr.rel target = $region3
    $region8: #{variational_encoder_forward.1} parent=1 // loop_exit
      _
    %2189 = vsyncpa [#allocation3], 1
    %s2190 = scalar_lea.sflag [#allocation3], 1
    %2191 = vsyncpa %s2190, 1

</llo_original>
